<compile_context>
chip_gen: v5e
topology: v5e:2x2
jax: 0.10.0
libtpu: 0.0.40
codegen_flags: <defaults>
</compile_context>

<pallas_src>
import functools

import jax
import jax.numpy as jnp
from jax.experimental import pallas as pl
from jax.experimental.pallas import tpu as pltpu


# ----------------------------------------------------------------------------
# Tiling helpers / compiler params
# ----------------------------------------------------------------------------

def _pick_tile(dim, preferred, align):
    """Largest tile <= preferred that divides `dim` and is `align`-aligned,
    falling back to the full extent (always legal for a BlockSpec)."""
    if dim <= preferred or dim % align != 0:
        return dim
    t = (min(preferred, dim) // align) * align
    while t >= align:
        if dim % t == 0:
            return t
        t -= align
    return dim


_MM_COMPILER_PARAMS = pltpu.CompilerParams(
    dimension_semantics=("parallel", "parallel", "arbitrary"),
    vmem_limit_bytes=48 * 1024 * 1024,   # fits v7x's 64 MiB VMEM with headroom
)


# ----------------------------------------------------------------------------
# Pallas kernels
# ----------------------------------------------------------------------------

def _matmul_bias_kernel(a_ref, w_ref, b_ref, o_ref, acc_ref, *, activation):
    """Tiled A @ W + b with optional fused GELU; f32 accumulator in VMEM."""
    @pl.when(pl.program_id(2) == 0)
    def _():
        acc_ref[...] = jnp.zeros_like(acc_ref)

    acc_ref[...] += jnp.dot(a_ref[...], w_ref[...],
                            preferred_element_type=jnp.float32)

    @pl.when(pl.program_id(2) == pl.num_programs(2) - 1)
    def _():
        acc = acc_ref[...] + b_ref[...].astype(jnp.float32)
        if activation == "gelu":
            acc = jax.nn.gelu(acc, approximate=True)
        o_ref[...] = acc.astype(o_ref.dtype)


def matmul_bias(a, w, b, activation=None, out_dtype=jnp.bfloat16,
                tm_pref=256, tn_pref=256, tk_pref=512):
    """(M,K) @ (K,N) + b, optional fused GELU, tiled + double-buffered."""
    M, K = a.shape
    N = w.shape[1]
    a = a.astype(jnp.bfloat16)
    w = w.astype(jnp.bfloat16)
    tm = _pick_tile(M, tm_pref, 8)
    tn = _pick_tile(N, tn_pref, 128)
    tk = _pick_tile(K, tk_pref, 128)
    grid = (M // tm, N // tn, K // tk)
    kernel = functools.partial(_matmul_bias_kernel, activation=activation)
    return pl.pallas_call(
        kernel,
        out_shape=jax.ShapeDtypeStruct((M, N), out_dtype),
        grid=grid,
        in_specs=[
            pl.BlockSpec((tm, tk), lambda i, j, k: (i, k)),
            pl.BlockSpec((tk, tn), lambda i, j, k: (k, j)),
            pl.BlockSpec((1, tn), lambda i, j, k: (0, j)),
        ],
        out_specs=pl.BlockSpec((tm, tn), lambda i, j, k: (i, j)),
        scratch_shapes=[pltpu.VMEM((tm, tn), jnp.float32)],
        compiler_params=_MM_COMPILER_PARAMS,
    )(a, w, b.reshape(1, N))


def _matmul_bias_add_ln_kernel(a_ref, w_ref, b_ref, r_ref, g_ref, bb_ref,
                               o_ref, acc_ref, *, eps):
    """Tiled A @ W + b, then fused (+ residual) -> LayerNorm epilogue."""
    @pl.when(pl.program_id(2) == 0)
    def _():
        acc_ref[...] = jnp.zeros_like(acc_ref)

    acc_ref[...] += jnp.dot(a_ref[...], w_ref[...],
                            preferred_element_type=jnp.float32)

    @pl.when(pl.program_id(2) == pl.num_programs(2) - 1)
    def _():
        x = (acc_ref[...] + b_ref[...].astype(jnp.float32)
             + r_ref[...].astype(jnp.float32))
        mu = jnp.mean(x, axis=-1, keepdims=True)
        var = jnp.mean(jnp.square(x - mu), axis=-1, keepdims=True)
        y = (x - mu) * jax.lax.rsqrt(var + eps)
        o_ref[...] = (y * g_ref[...].astype(jnp.float32)
                      + bb_ref[...].astype(jnp.float32)).astype(o_ref.dtype)


def matmul_bias_add_layernorm(a, w, b, residual, gamma, beta,
                              out_dtype=jnp.bfloat16, eps=1e-5,
                              tm_pref=256, tk_pref=512):
    """LayerNorm(residual + (A @ W + b)) fused into the matmul epilogue.
    LN reduces over the full feature dim, so the N axis is kept un-tiled."""
    M, K = a.shape
    N = w.shape[1]
    a = a.astype(jnp.bfloat16)
    w = w.astype(jnp.bfloat16)
    residual = residual.astype(jnp.bfloat16)
    tm = _pick_tile(M, tm_pref, 8)
    tk = _pick_tile(K, tk_pref, 128)
    grid = (M // tm, 1, K // tk)
    kernel = functools.partial(_matmul_bias_add_ln_kernel, eps=eps)
    return pl.pallas_call(
        kernel,
        out_shape=jax.ShapeDtypeStruct((M, N), out_dtype),
        grid=grid,
        in_specs=[
            pl.BlockSpec((tm, tk), lambda i, j, k: (i, k)),
            pl.BlockSpec((tk, N), lambda i, j, k: (k, 0)),
            pl.BlockSpec((1, N), lambda i, j, k: (0, 0)),
            pl.BlockSpec((tm, N), lambda i, j, k: (i, 0)),
            pl.BlockSpec((1, N), lambda i, j, k: (0, 0)),
            pl.BlockSpec((1, N), lambda i, j, k: (0, 0)),
        ],
        out_specs=pl.BlockSpec((tm, N), lambda i, j, k: (i, 0)),
        scratch_shapes=[pltpu.VMEM((tm, N), jnp.float32)],
        compiler_params=_MM_COMPILER_PARAMS,
    )(a, w, b.reshape(1, N), residual, gamma.reshape(1, N), beta.reshape(1, N))


def _causal_mha_kernel(qkv_ref, o_ref, *, num_heads, d_model, scale):
    """One batch element per grid point; all heads handled inside the kernel
    from a lane-dense (S, 3*D) qkv block (no HBM head transposes)."""
    S = qkv_ref.shape[1]
    Dh = d_model // num_heads
    qkv = qkv_ref[0]                                        # (S, 3*D) bf16
    row = jax.lax.broadcasted_iota(jnp.int32, (S, S), 0)
    col = jax.lax.broadcasted_iota(jnp.int32, (S, S), 1)
    causal = col <= row
    # TODO(synk): for long sequences, tile the KV axis (flash-style online
    # softmax + causal block skipping); the full (S, S) scores fit VMEM here.
    for h in range(num_heads):
        q = qkv[:, h * Dh:(h + 1) * Dh]
        k = qkv[:, d_model + h * Dh:d_model + (h + 1) * Dh]
        v = qkv[:, 2 * d_model + h * Dh:2 * d_model + (h + 1) * Dh]
        s = jnp.dot(q, k.T, preferred_element_type=jnp.float32) * scale
        s = jnp.where(causal, s, jnp.float32(-1e30))        # causal mask
        s = s - jnp.max(s, axis=-1, keepdims=True)
        p = jnp.exp(s)
        p = p * pl.reciprocal(jnp.sum(p, axis=-1, keepdims=True), approx=True)
        o = jnp.dot(p.astype(v.dtype), v, preferred_element_type=jnp.float32)
        o_ref[0, :, h * Dh:(h + 1) * Dh] = o.astype(o_ref.dtype)


def causal_mha(qkv, num_heads, d_model):
    """qkv: (B, S, 3*D) -> (B, S, D) causal multi-head self-attention."""
    B, S, threeD = qkv.shape
    Dh = d_model // num_heads
    scale = 1.0 / float(Dh) ** 0.5
    kernel = functools.partial(_causal_mha_kernel, num_heads=num_heads,
                               d_model=d_model, scale=scale)
    return pl.pallas_call(
        kernel,
        out_shape=jax.ShapeDtypeStruct((B, S, d_model), jnp.bfloat16),
        grid=(B,),
        in_specs=[pl.BlockSpec((1, S, threeD), lambda b: (b, 0, 0))],
        out_specs=pl.BlockSpec((1, S, d_model), lambda b: (b, 0, 0)),
        compiler_params=pltpu.CompilerParams(
            dimension_semantics=("parallel",),
            vmem_limit_bytes=48 * 1024 * 1024),
    )(qkv.astype(jnp.bfloat16))


# ----------------------------------------------------------------------------
# Parameter init (deterministic, synthetic)
# ----------------------------------------------------------------------------

def init_params(key, *, d_model, dff, num_heads, num_layers, patch_size,
                channels, image_size):
    num_patches = (image_size // patch_size) ** 2
    keys = jax.random.split(key, 2 + num_layers)

    def dense(k, shape, scale=0.02):
        # weights stored in bf16 (MXU input dtype); biases / LN params in f32
        return (scale * jax.random.normal(k, shape)).astype(jnp.bfloat16)

    params = {
        "patch_w": dense(keys[0], (channels * patch_size * patch_size, d_model)),
        "patch_b": jnp.zeros((d_model,), jnp.float32),
        "pos_embd": (0.02 * jax.random.normal(keys[1], (num_patches, d_model))
                     ).astype(jnp.float32),
        "layers": [],
    }
    for l in range(num_layers):
        lk = jax.random.split(keys[2 + l], 4)
        params["layers"].append({
            "w_qkv": dense(lk[0], (d_model, 3 * d_model)),
            "b_qkv": jnp.zeros((3 * d_model,), jnp.float32),
            "w_o": dense(lk[1], (d_model, d_model)),
            "b_o": jnp.zeros((d_model,), jnp.float32),
            "ln1_g": jnp.ones((d_model,), jnp.float32),
            "ln1_b": jnp.zeros((d_model,), jnp.float32),
            "w_ff1": dense(lk[2], (d_model, dff)),
            "b_ff1": jnp.zeros((dff,), jnp.float32),
            "w_ff2": dense(lk[3], (dff, d_model)),
            "b_ff2": jnp.zeros((d_model,), jnp.float32),
            "ln2_g": jnp.ones((d_model,), jnp.float32),
            "ln2_b": jnp.zeros((d_model,), jnp.float32),
        })
    return params


# ----------------------------------------------------------------------------
# Forward pass (glue in JAX, hot path in Pallas)
# ----------------------------------------------------------------------------

def dtrocr_forward(params, x, *, d_model, num_heads, patch_size,
                   batch_first=True):
    B, C, H, W = x.shape
    p = patch_size
    Hp, Wp = H // p, W // p
    S = Hp * Wp

    # --- Patch_Embd: Conv2d(k=s=p) == patchify + tiled matmul ----------------
    patches = (x.reshape(B, C, Hp, p, Wp, p)
                .transpose(0, 2, 4, 1, 3, 5)          # (B, Hp, Wp, C, p, p)
                .reshape(B * S, C * p * p))
    h = matmul_bias(patches, params["patch_w"], params["patch_b"])   # (B*S, D)
    h = (h.reshape(B, S, d_model) + params["pos_embd"][None]
         ).astype(jnp.bfloat16)

    # --- Decoder stack --------------------------------------------------------
    for lp in params["layers"]:
        x2d = h.reshape(B * S, d_model)

        # causal multi-head self-attention (heads sliced inside the kernel;
        # no head-major transposes through HBM)
        qkv = matmul_bias(x2d, lp["w_qkv"], lp["b_qkv"])             # (B*S, 3D)
        attn = causal_mha(qkv.reshape(B, S, 3 * d_model),
                          num_heads, d_model)                        # (B, S, D)
        attn2d = attn.reshape(B * S, d_model)

        # output projection + residual add + LayerNorm, fused (post-LN)
        h2d = matmul_bias_add_layernorm(attn2d, lp["w_o"], lp["b_o"],
                                        x2d, lp["ln1_g"], lp["ln1_b"])

        # feed-forward: GELU fused into FF1, residual+LN fused into FF2
        ff = matmul_bias(h2d, lp["w_ff1"], lp["b_ff1"], activation="gelu")
        h2d = matmul_bias_add_layernorm(ff, lp["w_ff2"], lp["b_ff2"],
                                        h2d, lp["ln2_g"], lp["ln2_b"])
        h = h2d.reshape(B, S, d_model)

    if not batch_first:
        # reference permutes to (S, B, D) before a seq-first decoder
        h = jnp.transpose(h, (1, 0, 2))
    return h.astype(jnp.float32)


# ----------------------------------------------------------------------------
# Demo
# ----------------------------------------------------------------------------

if __name__ == "__main__":
    # Small, module-consistent config.
    d_model, dff, num_heads, num_layers = 32, 64, 4, 2
    patch_size, channels, image_size = 4, 3, 16
    dropout, batch_first = 0.0, True
    B = 2

    key = jax.random.PRNGKey(0)
    k_params, k_input = jax.random.split(key)

    params = init_params(
        k_params, d_model=d_model, dff=dff, num_heads=num_heads,
        num_layers=num_layers, patch_size=patch_size, channels=channels,
        image_size=image_size)

    x = jax.random.normal(
        k_input, (B, channels, image_size, image_size), dtype=jnp.float32)

    fwd = jax.jit(functools.partial(
        dtrocr_forward, d_model=d_model, num_heads=num_heads,
        patch_size=patch_size, batch_first=batch_first))
    out = fwd(params, x)
    out = jax.block_until_ready(out)

    S = (image_size // patch_size) ** 2
    assert out.shape == (B, S, d_model), out.shape
    assert bool(jnp.all(jnp.isfinite(out)))
    print("KERNEL_OK")
</pallas_src>

<mosaic_0001>
module attributes {stable_mosaic.version = 11 : i64} {
  func.func @_matmul_bias_kernel(%arg0: i32, %arg1: i32, %arg2: i32, %arg3: memref<32x32xbf16, #tpu.memory_space<vmem>>, %arg4: memref<32x96xbf16, #tpu.memory_space<vmem>>, %arg5: memref<1x96xf32, #tpu.memory_space<vmem>>, %arg6: memref<32x96xbf16, #tpu.memory_space<vmem>>, %arg7: memref<32x96xf32, #tpu.memory_space<vmem>>) attributes {dimension_semantics = [#tpu.dimension_semantics<parallel>, #tpu.dimension_semantics<parallel>, #tpu.dimension_semantics<arbitrary>], iteration_bounds = array<i64: 1, 1, 1>, scalar_prefetch = 0 : i64, scratch_operands = 1 : i64, tpu.core_type = #tpu.core_type<tc>, window_params = [{transform_indices = @transform_0, window_bounds = array<i64: 32, 32>}, {transform_indices = @transform_1, window_bounds = array<i64: 32, 96>}, {transform_indices = @transform_2, window_bounds = array<i64: 1, 96>}, {transform_indices = @transform_3, window_bounds = array<i64: 32, 96>}]} {
    %c0_i32 = arith.constant 0 : i32
    %0 = arith.cmpi eq, %arg2, %c0_i32 : i32
    %1 = arith.extui %0 : i1 to i32
    %c0_i32_0 = arith.constant 0 : i32
    %2 = arith.cmpi ne, %1, %c0_i32_0 : i32
    scf.if %2 {
      %cst_10 = arith.constant 0.000000e+00 : f32
      %12 = vector.broadcast %cst_10 : f32 to vector<32x96xf32>
      %c0_11 = arith.constant 0 : index
      %c0_12 = arith.constant 0 : index
      %13 = vector.load %arg7[%c0_11, %c0_12] : memref<32x96xf32, #tpu.memory_space<vmem>>, vector<32x96xf32>
      tpu.vector_store %arg7[%c0_11, %c0_12], %12 {strides = array<i32>} : memref<32x96xf32, #tpu.memory_space<vmem>>, vector<32x96xf32>,
    } else {
    }
    %c0 = arith.constant 0 : index
    %c0_1 = arith.constant 0 : index
    %3 = vector.load %arg7[%c0, %c0_1] : memref<32x96xf32, #tpu.memory_space<vmem>>, vector<32x96xf32>
    %c0_2 = arith.constant 0 : index
    %c0_3 = arith.constant 0 : index
    %4 = vector.load %arg3[%c0_2, %c0_3] : memref<32x32xbf16, #tpu.memory_space<vmem>>, vector<32x32xbf16>
    %c0_4 = arith.constant 0 : index
    %c0_5 = arith.constant 0 : index
    %5 = vector.load %arg4[%c0_4, %c0_5] : memref<32x96xbf16, #tpu.memory_space<vmem>>, vector<32x96xbf16>
    %cst = arith.constant dense<0.000000e+00> : vector<32x96xf32>
    %6 = tpu.matmul %4, %5, %cst {dimension_numbers = #tpu.dot_dimension_numbers<[1], [0], [0], [1], [0, 0, 1, 1], [], []>} : vector<32x32xbf16>, vector<32x96xbf16>, vector<32x96xf32> -> vector<32x96xf32>
    %7 = arith.addf %3, %6 : vector<32x96xf32>
    %c0_6 = arith.constant 0 : index
    %c0_7 = arith.constant 0 : index
    %8 = vector.load %arg7[%c0_6, %c0_7] : memref<32x96xf32, #tpu.memory_space<vmem>>, vector<32x96xf32>
    tpu.vector_store %arg7[%c0_6, %c0_7], %7 {strides = array<i32>} : memref<32x96xf32, #tpu.memory_space<vmem>>, vector<32x96xf32>,
    %c0_i32_8 = arith.constant 0 : i32
    %9 = arith.cmpi eq, %arg2, %c0_i32_8 : i32
    %10 = arith.extui %9 : i1 to i32
    %c0_i32_9 = arith.constant 0 : i32
    %11 = arith.cmpi ne, %10, %c0_i32_9 : i32
    scf.if %11 {
      %c0_10 = arith.constant 0 : index
      %c0_11 = arith.constant 0 : index
      %12 = vector.load %arg7[%c0_10, %c0_11] : memref<32x96xf32, #tpu.memory_space<vmem>>, vector<32x96xf32>
      %c0_12 = arith.constant 0 : index
      %c0_13 = arith.constant 0 : index
      %13 = vector.load %arg5[%c0_12, %c0_13] : memref<1x96xf32, #tpu.memory_space<vmem>>, vector<1x96xf32>
      %14 = vector.broadcast %13 : vector<1x96xf32> to vector<32x96xf32>
      %15 = arith.addf %12, %14 : vector<32x96xf32>
      %16 = arith.truncf %15 : vector<32x96xf32> to vector<32x96xbf16>
      %c0_14 = arith.constant 0 : index
      %c0_15 = arith.constant 0 : index
      %17 = vector.load %arg6[%c0_14, %c0_15] : memref<32x96xbf16, #tpu.memory_space<vmem>>, vector<32x96xbf16>
      tpu.vector_store %arg6[%c0_14, %c0_15], %16 {strides = array<i32>} : memref<32x96xbf16, #tpu.memory_space<vmem>>, vector<32x96xbf16>,
    } else {
    }
    return
  }
  func.func @transform_0(%arg0: i32, %arg1: i32, %arg2: i32) -> (i32, i32) {
    %c0_i32 = arith.constant 0 : i32
    return %arg0, %arg2 : i32, i32
  }
  func.func @transform_1(%arg0: i32, %arg1: i32, %arg2: i32) -> (i32, i32) {
    %c0_i32 = arith.constant 0 : i32
    return %arg2, %arg1 : i32, i32
  }
  func.func @transform_2(%arg0: i32, %arg1: i32, %arg2: i32) -> (i32, i32) {
    %c0_i32 = arith.constant 0 : i32
    %c0_i32_0 = arith.constant 0 : i32
    return %c0_i32, %arg1 : i32, i32
  }
  func.func @transform_3(%arg0: i32, %arg1: i32, %arg2: i32) -> (i32, i32) {
    %c0_i32 = arith.constant 0 : i32
    return %arg0, %arg1 : i32, i32
  }
}

module attributes {stable_mosaic.version = 11 : i64} {
  func.func @_matmul_bias_add_ln_kernel(%arg0: i32, %arg1: i32, %arg2: i32, %arg3: memref<32x32xbf16, #tpu.memory_space<vmem>>, %arg4: memref<32x32xbf16, #tpu.memory_space<vmem>>, %arg5: memref<1x32xf32, #tpu.memory_space<vmem>>, %arg6: memref<32x32xbf16, #tpu.memory_space<vmem>>, %arg7: memref<1x32xf32, #tpu.memory_space<vmem>>, %arg8: memref<1x32xf32, #tpu.memory_space<vmem>>, %arg9: memref<32x32xbf16, #tpu.memory_space<vmem>>, %arg10: memref<32x32xf32, #tpu.memory_space<vmem>>) attributes {dimension_semantics = [#tpu.dimension_semantics<parallel>, #tpu.dimension_semantics<parallel>, #tpu.dimension_semantics<arbitrary>], iteration_bounds = array<i64: 1, 1, 1>, scalar_prefetch = 0 : i64, scratch_operands = 1 : i64, tpu.core_type = #tpu.core_type<tc>, window_params = [{transform_indices = @transform_0, window_bounds = array<i64: 32, 32>}, {transform_indices = @transform_1, window_bounds = array<i64: 32, 32>}, {pipeline_mode = #tpu.pipeline_mode<synchronous>, transform_indices = @transform_2, window_bounds = array<i64: 1, 32>}, {transform_indices = @transform_3, window_bounds = array<i64: 32, 32>}, {pipeline_mode = #tpu.pipeline_mode<synchronous>, transform_indices = @transform_4, window_bounds = array<i64: 1, 32>}, {pipeline_mode = #tpu.pipeline_mode<synchronous>, transform_indices = @transform_5, window_bounds = array<i64: 1, 32>}, {transform_indices = @transform_6, window_bounds = array<i64: 32, 32>}]} {
    %c0_i32 = arith.constant 0 : i32
    %0 = arith.cmpi eq, %arg2, %c0_i32 : i32
    %1 = arith.extui %0 : i1 to i32
    %c0_i32_0 = arith.constant 0 : i32
    %2 = arith.cmpi ne, %1, %c0_i32_0 : i32
    scf.if %2 {
      %cst_10 = arith.constant 0.000000e+00 : f32
      %12 = vector.broadcast %cst_10 : f32 to vector<32x32xf32>
      %c0_11 = arith.constant 0 : index
      %c0_12 = arith.constant 0 : index
      %13 = vector.load %arg10[%c0_11, %c0_12] : memref<32x32xf32, #tpu.memory_space<vmem>>, vector<32x32xf32>
      tpu.vector_store %arg10[%c0_11, %c0_12], %12 {strides = array<i32>} : memref<32x32xf32, #tpu.memory_space<vmem>>, vector<32x32xf32>,
    } else {
    }
    %c0 = arith.constant 0 : index
    %c0_1 = arith.constant 0 : index
    %3 = vector.load %arg10[%c0, %c0_1] : memref<32x32xf32, #tpu.memory_space<vmem>>, vector<32x32xf32>
    %c0_2 = arith.constant 0 : index
    %c0_3 = arith.constant 0 : index
    %4 = vector.load %arg3[%c0_2, %c0_3] : memref<32x32xbf16, #tpu.memory_space<vmem>>, vector<32x32xbf16>
    %c0_4 = arith.constant 0 : index
    %c0_5 = arith.constant 0 : index
    %5 = vector.load %arg4[%c0_4, %c0_5] : memref<32x32xbf16, #tpu.memory_space<vmem>>, vector<32x32xbf16>
    %cst = arith.constant dense<0.000000e+00> : vector<32x32xf32>
    %6 = tpu.matmul %4, %5, %cst {dimension_numbers = #tpu.dot_dimension_numbers<[1], [0], [0], [1], [0, 0, 1, 1], [], []>} : vector<32x32xbf16>, vector<32x32xbf16>, vector<32x32xf32> -> vector<32x32xf32>
    %7 = arith.addf %3, %6 : vector<32x32xf32>
    %c0_6 = arith.constant 0 : index
    %c0_7 = arith.constant 0 : index
    %8 = vector.load %arg10[%c0_6, %c0_7] : memref<32x32xf32, #tpu.memory_space<vmem>>, vector<32x32xf32>
    tpu.vector_store %arg10[%c0_6, %c0_7], %7 {strides = array<i32>} : memref<32x32xf32, #tpu.memory_space<vmem>>, vector<32x32xf32>,
    %c0_i32_8 = arith.constant 0 : i32
    %9 = arith.cmpi eq, %arg2, %c0_i32_8 : i32
    %10 = arith.extui %9 : i1 to i32
    %c0_i32_9 = arith.constant 0 : i32
    %11 = arith.cmpi ne, %10, %c0_i32_9 : i32
    scf.if %11 {
      %c0_10 = arith.constant 0 : index
      %c0_11 = arith.constant 0 : index
      %12 = vector.load %arg10[%c0_10, %c0_11] : memref<32x32xf32, #tpu.memory_space<vmem>>, vector<32x32xf32>
      %c0_12 = arith.constant 0 : index
      %c0_13 = arith.constant 0 : index
      %13 = vector.load %arg5[%c0_12, %c0_13] : memref<1x32xf32, #tpu.memory_space<vmem>>, vector<1x32xf32>
      %14 = vector.broadcast %13 : vector<1x32xf32> to vector<32x32xf32>
      %15 = arith.addf %12, %14 : vector<32x32xf32>
      %c0_14 = arith.constant 0 : index
      %c0_15 = arith.constant 0 : index
      %16 = vector.load %arg6[%c0_14, %c0_15] : memref<32x32xbf16, #tpu.memory_space<vmem>>, vector<32x32xbf16>
      %17 = arith.extf %16 : vector<32x32xbf16> to vector<32x32xf32>
      %18 = arith.addf %15, %17 : vector<32x32xf32>
      %cst_16 = arith.constant dense<0.000000e+00> : vector<32xf32>
      %19 = vector.multi_reduction <add>, %18, %cst_16 [1] : vector<32x32xf32> to vector<32xf32>
      %20 = vector.shape_cast %19 : vector<32xf32> to vector<32x1xf32>
      %cst_17 = arith.constant 3.200000e+01 : f32
      %21 = vector.broadcast %cst_17 : f32 to vector<32x1xf32>
      %22 = arith.divf %20, %21 : vector<32x1xf32>
      %23 = vector.broadcast %22 : vector<32x1xf32> to vector<32x32xf32>
      %24 = arith.subf %18, %23 : vector<32x32xf32>
      %25 = arith.mulf %24, %24 : vector<32x32xf32>
      %cst_18 = arith.constant dense<0.000000e+00> : vector<32xf32>
      %26 = vector.multi_reduction <add>, %25, %cst_18 [1] : vector<32x32xf32> to vector<32xf32>
      %27 = vector.shape_cast %26 : vector<32xf32> to vector<32x1xf32>
      %cst_19 = arith.constant 3.200000e+01 : f32
      %28 = vector.broadcast %cst_19 : f32 to vector<32x1xf32>
      %29 = arith.divf %27, %28 : vector<32x1xf32>
      %30 = vector.broadcast %22 : vector<32x1xf32> to vector<32x32xf32>
      %31 = arith.subf %18, %30 : vector<32x32xf32>
      %cst_20 = arith.constant 9.99999974E-6 : f32
      %32 = vector.broadcast %cst_20 : f32 to vector<32x1xf32>
      %33 = arith.addf %29, %32 : vector<32x1xf32>
      %34 = math.rsqrt %33 : vector<32x1xf32>
      %35 = vector.broadcast %34 : vector<32x1xf32> to vector<32x32xf32>
      %36 = arith.mulf %31, %35 : vector<32x32xf32>
      %c0_21 = arith.constant 0 : index
      %c0_22 = arith.constant 0 : index
      %37 = vector.load %arg7[%c0_21, %c0_22] : memref<1x32xf32, #tpu.memory_space<vmem>>, vector<1x32xf32>
      %38 = vector.broadcast %37 : vector<1x32xf32> to vector<32x32xf32>
      %39 = arith.mulf %36, %38 : vector<32x32xf32>
      %c0_23 = arith.constant 0 : index
      %c0_24 = arith.constant 0 : index
      %40 = vector.load %arg8[%c0_23, %c0_24] : memref<1x32xf32, #tpu.memory_space<vmem>>, vector<1x32xf32>
      %41 = vector.broadcast %40 : vector<1x32xf32> to vector<32x32xf32>
      %42 = arith.addf %39, %41 : vector<32x32xf32>
      %43 = arith.truncf %42 : vector<32x32xf32> to vector<32x32xbf16>
      %c0_25 = arith.constant 0 : index
      %c0_26 = arith.constant 0 : index
      %44 = vector.load %arg9[%c0_25, %c0_26] : memref<32x32xbf16, #tpu.memory_space<vmem>>, vector<32x32xbf16>
      tpu.vector_store %arg9[%c0_25, %c0_26], %43 {strides = array<i32>} : memref<32x32xbf16, #tpu.memory_space<vmem>>, vector<32x32xbf16>,
    } else {
    }
    return
  }
  func.func @transform_0(%arg0: i32, %arg1: i32, %arg2: i32) -> (i32, i32) {
    %c0_i32 = arith.constant 0 : i32
    return %arg0, %arg2 : i32, i32
  }
  func.func @transform_1(%arg0: i32, %arg1: i32, %arg2: i32) -> (i32, i32) {
    %c0_i32 = arith.constant 0 : i32
    %c0_i32_0 = arith.constant 0 : i32
    return %arg2, %c0_i32 : i32, i32
  }
  func.func @transform_2(%arg0: i32, %arg1: i32, %arg2: i32) -> (i32, i32) {
    %c0_i32 = arith.constant 0 : i32
    %c0_i32_0 = arith.constant 0 : i32
    %c0_i32_1 = arith.constant 0 : i32
    return %c0_i32, %c0_i32_0 : i32, i32
  }
  func.func @transform_3(%arg0: i32, %arg1: i32, %arg2: i32) -> (i32, i32) {
    %c0_i32 = arith.constant 0 : i32
    %c0_i32_0 = arith.constant 0 : i32
    return %arg0, %c0_i32 : i32, i32
  }
  func.func @transform_4(%arg0: i32, %arg1: i32, %arg2: i32) -> (i32, i32) {
    %c0_i32 = arith.constant 0 : i32
    %c0_i32_0 = arith.constant 0 : i32
    %c0_i32_1 = arith.constant 0 : i32
    return %c0_i32, %c0_i32_0 : i32, i32
  }
  func.func @transform_5(%arg0: i32, %arg1: i32, %arg2: i32) -> (i32, i32) {
    %c0_i32 = arith.constant 0 : i32
    %c0_i32_0 = arith.constant 0 : i32
    %c0_i32_1 = arith.constant 0 : i32
    return %c0_i32, %c0_i32_0 : i32, i32
  }
  func.func @transform_6(%arg0: i32, %arg1: i32, %arg2: i32) -> (i32, i32) {
    %c0_i32 = arith.constant 0 : i32
    %c0_i32_0 = arith.constant 0 : i32
    return %arg0, %c0_i32 : i32, i32
  }
}

module attributes {stable_mosaic.version = 11 : i64} {
  func.func @_matmul_bias_kernel(%arg0: i32, %arg1: i32, %arg2: i32, %arg3: memref<32x48xbf16, #tpu.memory_space<vmem>>, %arg4: memref<48x32xbf16, #tpu.memory_space<vmem>>, %arg5: memref<1x32xf32, #tpu.memory_space<vmem>>, %arg6: memref<32x32xbf16, #tpu.memory_space<vmem>>, %arg7: memref<32x32xf32, #tpu.memory_space<vmem>>) attributes {dimension_semantics = [#tpu.dimension_semantics<parallel>, #tpu.dimension_semantics<parallel>, #tpu.dimension_semantics<arbitrary>], iteration_bounds = array<i64: 1, 1, 1>, scalar_prefetch = 0 : i64, scratch_operands = 1 : i64, tpu.core_type = #tpu.core_type<tc>, window_params = [{transform_indices = @transform_0, window_bounds = array<i64: 32, 48>}, {transform_indices = @transform_1, window_bounds = array<i64: 48, 32>}, {transform_indices = @transform_2, window_bounds = array<i64: 1, 32>}, {transform_indices = @transform_3, window_bounds = array<i64: 32, 32>}]} {
    %c0_i32 = arith.constant 0 : i32
    %0 = arith.cmpi eq, %arg2, %c0_i32 : i32
    %1 = arith.extui %0 : i1 to i32
    %c0_i32_0 = arith.constant 0 : i32
    %2 = arith.cmpi ne, %1, %c0_i32_0 : i32
    scf.if %2 {
      %cst_10 = arith.constant 0.000000e+00 : f32
      %12 = vector.broadcast %cst_10 : f32 to vector<32x32xf32>
      %c0_11 = arith.constant 0 : index
      %c0_12 = arith.constant 0 : index
      %13 = vector.load %arg7[%c0_11, %c0_12] : memref<32x32xf32, #tpu.memory_space<vmem>>, vector<32x32xf32>
      tpu.vector_store %arg7[%c0_11, %c0_12], %12 {strides = array<i32>} : memref<32x32xf32, #tpu.memory_space<vmem>>, vector<32x32xf32>,
    } else {
    }
    %c0 = arith.constant 0 : index
    %c0_1 = arith.constant 0 : index
    %3 = vector.load %arg7[%c0, %c0_1] : memref<32x32xf32, #tpu.memory_space<vmem>>, vector<32x32xf32>
    %c0_2 = arith.constant 0 : index
    %c0_3 = arith.constant 0 : index
    %4 = vector.load %arg3[%c0_2, %c0_3] : memref<32x48xbf16, #tpu.memory_space<vmem>>, vector<32x48xbf16>
    %c0_4 = arith.constant 0 : index
    %c0_5 = arith.constant 0 : index
    %5 = vector.load %arg4[%c0_4, %c0_5] : memref<48x32xbf16, #tpu.memory_space<vmem>>, vector<48x32xbf16>
    %cst = arith.constant dense<0.000000e+00> : vector<32x32xf32>
    %6 = tpu.matmul %4, %5, %cst {dimension_numbers = #tpu.dot_dimension_numbers<[1], [0], [0], [1], [0, 0, 1, 1], [], []>} : vector<32x48xbf16>, vector<48x32xbf16>, vector<32x32xf32> -> vector<32x32xf32>
    %7 = arith.addf %3, %6 : vector<32x32xf32>
    %c0_6 = arith.constant 0 : index
    %c0_7 = arith.constant 0 : index
    %8 = vector.load %arg7[%c0_6, %c0_7] : memref<32x32xf32, #tpu.memory_space<vmem>>, vector<32x32xf32>
    tpu.vector_store %arg7[%c0_6, %c0_7], %7 {strides = array<i32>} : memref<32x32xf32, #tpu.memory_space<vmem>>, vector<32x32xf32>,
    %c0_i32_8 = arith.constant 0 : i32
    %9 = arith.cmpi eq, %arg2, %c0_i32_8 : i32
    %10 = arith.extui %9 : i1 to i32
    %c0_i32_9 = arith.constant 0 : i32
    %11 = arith.cmpi ne, %10, %c0_i32_9 : i32
    scf.if %11 {
      %c0_10 = arith.constant 0 : index
      %c0_11 = arith.constant 0 : index
      %12 = vector.load %arg7[%c0_10, %c0_11] : memref<32x32xf32, #tpu.memory_space<vmem>>, vector<32x32xf32>
      %c0_12 = arith.constant 0 : index
      %c0_13 = arith.constant 0 : index
      %13 = vector.load %arg5[%c0_12, %c0_13] : memref<1x32xf32, #tpu.memory_space<vmem>>, vector<1x32xf32>
      %14 = vector.broadcast %13 : vector<1x32xf32> to vector<32x32xf32>
      %15 = arith.addf %12, %14 : vector<32x32xf32>
      %16 = arith.truncf %15 : vector<32x32xf32> to vector<32x32xbf16>
      %c0_14 = arith.constant 0 : index
      %c0_15 = arith.constant 0 : index
      %17 = vector.load %arg6[%c0_14, %c0_15] : memref<32x32xbf16, #tpu.memory_space<vmem>>, vector<32x32xbf16>
      tpu.vector_store %arg6[%c0_14, %c0_15], %16 {strides = array<i32>} : memref<32x32xbf16, #tpu.memory_space<vmem>>, vector<32x32xbf16>,
    } else {
    }
    return
  }
  func.func @transform_0(%arg0: i32, %arg1: i32, %arg2: i32) -> (i32, i32) {
    %c0_i32 = arith.constant 0 : i32
    return %arg0, %arg2 : i32, i32
  }
  func.func @transform_1(%arg0: i32, %arg1: i32, %arg2: i32) -> (i32, i32) {
    %c0_i32 = arith.constant 0 : i32
    return %arg2, %arg1 : i32, i32
  }
  func.func @transform_2(%arg0: i32, %arg1: i32, %arg2: i32) -> (i32, i32) {
    %c0_i32 = arith.constant 0 : i32
    %c0_i32_0 = arith.constant 0 : i32
    return %c0_i32, %arg1 : i32, i32
  }
  func.func @transform_3(%arg0: i32, %arg1: i32, %arg2: i32) -> (i32, i32) {
    %c0_i32 = arith.constant 0 : i32
    return %arg0, %arg1 : i32, i32
  }
}

module attributes {stable_mosaic.version = 11 : i64} {
  func.func @_causal_mha_kernel(%arg0: i32, %arg1: memref<1x16x96xbf16, #tpu.memory_space<vmem>>, %arg2: memref<1x16x32xbf16, #tpu.memory_space<vmem>>) attributes {dimension_semantics = [#tpu.dimension_semantics<parallel>], iteration_bounds = array<i64: 2>, scalar_prefetch = 0 : i64, scratch_operands = 0 : i64, tpu.core_type = #tpu.core_type<tc>, window_params = [{transform_indices = @transform_0, window_bounds = array<i64: 1, 16, 96>}, {transform_indices = @transform_1, window_bounds = array<i64: 1, 16, 32>}]} {
    %c0 = arith.constant 0 : index
    %c0_0 = arith.constant 0 : index
    %c0_1 = arith.constant 0 : index
    %0 = vector.load %arg1[%c0, %c0_0, %c0_1] : memref<1x16x96xbf16, #tpu.memory_space<vmem>>, vector<1x16x96xbf16>
    %1 = vector.shape_cast %0 : vector<1x16x96xbf16> to vector<16x96xbf16>
    %2 = tpu.iota {dimensions = array<i32: 0>} : vector<16x16xi32>
    %3 = tpu.iota {dimensions = array<i32: 1>} : vector<16x16xi32>
    %4 = arith.cmpi sle, %3, %2 : vector<16x16xi32>
    %5 = vector.extract_strided_slice %1 {offsets = [0, 0], sizes = [16, 8], strides = [1, 1]} : vector<16x96xbf16> to vector<16x8xbf16>
    %6 = vector.extract_strided_slice %1 {offsets = [0, 32], sizes = [16, 8], strides = [1, 1]} : vector<16x96xbf16> to vector<16x8xbf16>
    %7 = vector.extract_strided_slice %1 {offsets = [0, 64], sizes = [16, 8], strides = [1, 1]} : vector<16x96xbf16> to vector<16x8xbf16>
    %8 = tpu.transpose %6, [1, 0] : vector<16x8xbf16> -> vector<8x16xbf16>
    %cst = arith.constant dense<0.000000e+00> : vector<16x16xf32>
    %9 = tpu.matmul %5, %8, %cst {dimension_numbers = #tpu.dot_dimension_numbers<[1], [0], [0], [1], [0, 0, 1, 1], [], []>} : vector<16x8xbf16>, vector<8x16xbf16>, vector<16x16xf32> -> vector<16x16xf32>
    %cst_2 = arith.constant 0.353553385 : f32
    %10 = vector.broadcast %cst_2 : f32 to vector<16x16xf32>
    %11 = arith.mulf %9, %10 : vector<16x16xf32>
    %cst_3 = arith.constant -1.000000e+30 : f32
    %12 = vector.broadcast %cst_3 : f32 to vector<16x16xf32>
    %13 = arith.select %4, %11, %12 : vector<16x16xi1>, vector<16x16xf32>
    %cst_4 = arith.constant dense<0xFF800000> : vector<16xf32>
    %14 = vector.multi_reduction <maximumf>, %13, %cst_4 [1] : vector<16x16xf32> to vector<16xf32>
    %15 = vector.shape_cast %14 : vector<16xf32> to vector<16x1xf32>
    %16 = vector.broadcast %15 : vector<16x1xf32> to vector<16x16xf32>
    %17 = arith.subf %13, %16 : vector<16x16xf32>
    %18 = math.exp %17 : vector<16x16xf32>
    %cst_5 = arith.constant dense<0.000000e+00> : vector<16xf32>
    %19 = vector.multi_reduction <add>, %18, %cst_5 [1] : vector<16x16xf32> to vector<16xf32>
    %20 = vector.shape_cast %19 : vector<16xf32> to vector<16x1xf32>
    %21 = tpu.reciprocal %20 {approx = true} : vector<16x1xf32> -> vector<16x1xf32>
    %22 = vector.broadcast %21 : vector<16x1xf32> to vector<16x16xf32>
    %23 = arith.mulf %18, %22 : vector<16x16xf32>
    %24 = arith.truncf %23 : vector<16x16xf32> to vector<16x16xbf16>
    %cst_6 = arith.constant dense<0.000000e+00> : vector<16x8xf32>
    %25 = tpu.matmul %24, %7, %cst_6 {dimension_numbers = #tpu.dot_dimension_numbers<[1], [0], [0], [1], [0, 0, 1, 1], [], []>} : vector<16x16xbf16>, vector<16x8xbf16>, vector<16x8xf32> -> vector<16x8xf32>
    %26 = arith.truncf %25 : vector<16x8xf32> to vector<16x8xbf16>
    %c0_7 = arith.constant 0 : index
    %c0_8 = arith.constant 0 : index
    %c0_9 = arith.constant 0 : index
    %27 = vector.load %arg2[%c0_7, %c0_8, %c0_9] : memref<1x16x32xbf16, #tpu.memory_space<vmem>>, vector<1x16x8xbf16>
    %28 = vector.shape_cast %27 : vector<1x16x8xbf16> to vector<16x8xbf16>
    %29 = vector.shape_cast %26 : vector<16x8xbf16> to vector<1x16x8xbf16>
    tpu.vector_store %arg2[%c0_7, %c0_8, %c0_9], %29 {strides = array<i32>} : memref<1x16x32xbf16, #tpu.memory_space<vmem>>, vector<1x16x8xbf16>,
    %30 = vector.extract_strided_slice %1 {offsets = [0, 8], sizes = [16, 8], strides = [1, 1]} : vector<16x96xbf16> to vector<16x8xbf16>
    %31 = vector.extract_strided_slice %1 {offsets = [0, 40], sizes = [16, 8], strides = [1, 1]} : vector<16x96xbf16> to vector<16x8xbf16>
    %32 = vector.extract_strided_slice %1 {offsets = [0, 72], sizes = [16, 8], strides = [1, 1]} : vector<16x96xbf16> to vector<16x8xbf16>
    %33 = tpu.transpose %31, [1, 0] : vector<16x8xbf16> -> vector<8x16xbf16>
    %cst_10 = arith.constant dense<0.000000e+00> : vector<16x16xf32>
    %34 = tpu.matmul %30, %33, %cst_10 {dimension_numbers = #tpu.dot_dimension_numbers<[1], [0], [0], [1], [0, 0, 1, 1], [], []>} : vector<16x8xbf16>, vector<8x16xbf16>, vector<16x16xf32> -> vector<16x16xf32>
    %cst_11 = arith.constant 0.353553385 : f32
    %35 = vector.broadcast %cst_11 : f32 to vector<16x16xf32>
    %36 = arith.mulf %34, %35 : vector<16x16xf32>
    %cst_12 = arith.constant -1.000000e+30 : f32
    %37 = vector.broadcast %cst_12 : f32 to vector<16x16xf32>
    %38 = arith.select %4, %36, %37 : vector<16x16xi1>, vector<16x16xf32>
    %cst_13 = arith.constant dense<0xFF800000> : vector<16xf32>
    %39 = vector.multi_reduction <maximumf>, %38, %cst_13 [1] : vector<16x16xf32> to vector<16xf32>
    %40 = vector.shape_cast %39 : vector<16xf32> to vector<16x1xf32>
    %41 = vector.broadcast %40 : vector<16x1xf32> to vector<16x16xf32>
    %42 = arith.subf %38, %41 : vector<16x16xf32>
    %43 = math.exp %42 : vector<16x16xf32>
    %cst_14 = arith.constant dense<0.000000e+00> : vector<16xf32>
    %44 = vector.multi_reduction <add>, %43, %cst_14 [1] : vector<16x16xf32> to vector<16xf32>
    %45 = vector.shape_cast %44 : vector<16xf32> to vector<16x1xf32>
    %46 = tpu.reciprocal %45 {approx = true} : vector<16x1xf32> -> vector<16x1xf32>
    %47 = vector.broadcast %46 : vector<16x1xf32> to vector<16x16xf32>
    %48 = arith.mulf %43, %47 : vector<16x16xf32>
    %49 = arith.truncf %48 : vector<16x16xf32> to vector<16x16xbf16>
    %cst_15 = arith.constant dense<0.000000e+00> : vector<16x8xf32>
    %50 = tpu.matmul %49, %32, %cst_15 {dimension_numbers = #tpu.dot_dimension_numbers<[1], [0], [0], [1], [0, 0, 1, 1], [], []>} : vector<16x16xbf16>, vector<16x8xbf16>, vector<16x8xf32> -> vector<16x8xf32>
    %51 = arith.truncf %50 : vector<16x8xf32> to vector<16x8xbf16>
    %c0_16 = arith.constant 0 : index
    %c0_17 = arith.constant 0 : index
    %c8 = arith.constant 8 : index
    %52 = vector.load %arg2[%c0_16, %c0_17, %c8] : memref<1x16x32xbf16, #tpu.memory_space<vmem>>, vector<1x16x8xbf16>
    %53 = vector.shape_cast %52 : vector<1x16x8xbf16> to vector<16x8xbf16>
    %54 = vector.shape_cast %51 : vector<16x8xbf16> to vector<1x16x8xbf16>
    tpu.vector_store %arg2[%c0_16, %c0_17, %c8], %54 {strides = array<i32>} : memref<1x16x32xbf16, #tpu.memory_space<vmem>>, vector<1x16x8xbf16>,
    %55 = vector.extract_strided_slice %1 {offsets = [0, 16], sizes = [16, 8], strides = [1, 1]} : vector<16x96xbf16> to vector<16x8xbf16>
    %56 = vector.extract_strided_slice %1 {offsets = [0, 48], sizes = [16, 8], strides = [1, 1]} : vector<16x96xbf16> to vector<16x8xbf16>
    %57 = vector.extract_strided_slice %1 {offsets = [0, 80], sizes = [16, 8], strides = [1, 1]} : vector<16x96xbf16> to vector<16x8xbf16>
    %58 = tpu.transpose %56, [1, 0] : vector<16x8xbf16> -> vector<8x16xbf16>
    %cst_18 = arith.constant dense<0.000000e+00> : vector<16x16xf32>
    %59 = tpu.matmul %55, %58, %cst_18 {dimension_numbers = #tpu.dot_dimension_numbers<[1], [0], [0], [1], [0, 0, 1, 1], [], []>} : vector<16x8xbf16>, vector<8x16xbf16>, vector<16x16xf32> -> vector<16x16xf32>
    %cst_19 = arith.constant 0.353553385 : f32
    %60 = vector.broadcast %cst_19 : f32 to vector<16x16xf32>
    %61 = arith.mulf %59, %60 : vector<16x16xf32>
    %cst_20 = arith.constant -1.000000e+30 : f32
    %62 = vector.broadcast %cst_20 : f32 to vector<16x16xf32>
    %63 = arith.select %4, %61, %62 : vector<16x16xi1>, vector<16x16xf32>
    %cst_21 = arith.constant dense<0xFF800000> : vector<16xf32>
    %64 = vector.multi_reduction <maximumf>, %63, %cst_21 [1] : vector<16x16xf32> to vector<16xf32>
    %65 = vector.shape_cast %64 : vector<16xf32> to vector<16x1xf32>
    %66 = vector.broadcast %65 : vector<16x1xf32> to vector<16x16xf32>
    %67 = arith.subf %63, %66 : vector<16x16xf32>
    %68 = math.exp %67 : vector<16x16xf32>
    %cst_22 = arith.constant dense<0.000000e+00> : vector<16xf32>
    %69 = vector.multi_reduction <add>, %68, %cst_22 [1] : vector<16x16xf32> to vector<16xf32>
    %70 = vector.shape_cast %69 : vector<16xf32> to vector<16x1xf32>
    %71 = tpu.reciprocal %70 {approx = true} : vector<16x1xf32> -> vector<16x1xf32>
    %72 = vector.broadcast %71 : vector<16x1xf32> to vector<16x16xf32>
    %73 = arith.mulf %68, %72 : vector<16x16xf32>
    %74 = arith.truncf %73 : vector<16x16xf32> to vector<16x16xbf16>
    %cst_23 = arith.constant dense<0.000000e+00> : vector<16x8xf32>
    %75 = tpu.matmul %74, %57, %cst_23 {dimension_numbers = #tpu.dot_dimension_numbers<[1], [0], [0], [1], [0, 0, 1, 1], [], []>} : vector<16x16xbf16>, vector<16x8xbf16>, vector<16x8xf32> -> vector<16x8xf32>
    %76 = arith.truncf %75 : vector<16x8xf32> to vector<16x8xbf16>
    %c0_24 = arith.constant 0 : index
    %c0_25 = arith.constant 0 : index
    %c16 = arith.constant 16 : index
    %77 = vector.load %arg2[%c0_24, %c0_25, %c16] : memref<1x16x32xbf16, #tpu.memory_space<vmem>>, vector<1x16x8xbf16>
    %78 = vector.shape_cast %77 : vector<1x16x8xbf16> to vector<16x8xbf16>
    %79 = vector.shape_cast %76 : vector<16x8xbf16> to vector<1x16x8xbf16>
    tpu.vector_store %arg2[%c0_24, %c0_25, %c16], %79 {strides = array<i32>} : memref<1x16x32xbf16, #tpu.memory_space<vmem>>, vector<1x16x8xbf16>,
    %80 = vector.extract_strided_slice %1 {offsets = [0, 24], sizes = [16, 8], strides = [1, 1]} : vector<16x96xbf16> to vector<16x8xbf16>
    %81 = vector.extract_strided_slice %1 {offsets = [0, 56], sizes = [16, 8], strides = [1, 1]} : vector<16x96xbf16> to vector<16x8xbf16>
    %82 = vector.extract_strided_slice %1 {offsets = [0, 88], sizes = [16, 8], strides = [1, 1]} : vector<16x96xbf16> to vector<16x8xbf16>
    %83 = tpu.transpose %81, [1, 0] : vector<16x8xbf16> -> vector<8x16xbf16>
    %cst_26 = arith.constant dense<0.000000e+00> : vector<16x16xf32>
    %84 = tpu.matmul %80, %83, %cst_26 {dimension_numbers = #tpu.dot_dimension_numbers<[1], [0], [0], [1], [0, 0, 1, 1], [], []>} : vector<16x8xbf16>, vector<8x16xbf16>, vector<16x16xf32> -> vector<16x16xf32>
    %cst_27 = arith.constant 0.353553385 : f32
    %85 = vector.broadcast %cst_27 : f32 to vector<16x16xf32>
    %86 = arith.mulf %84, %85 : vector<16x16xf32>
    %cst_28 = arith.constant -1.000000e+30 : f32
    %87 = vector.broadcast %cst_28 : f32 to vector<16x16xf32>
    %88 = arith.select %4, %86, %87 : vector<16x16xi1>, vector<16x16xf32>
    %cst_29 = arith.constant dense<0xFF800000> : vector<16xf32>
    %89 = vector.multi_reduction <maximumf>, %88, %cst_29 [1] : vector<16x16xf32> to vector<16xf32>
    %90 = vector.shape_cast %89 : vector<16xf32> to vector<16x1xf32>
    %91 = vector.broadcast %90 : vector<16x1xf32> to vector<16x16xf32>
    %92 = arith.subf %88, %91 : vector<16x16xf32>
    %93 = math.exp %92 : vector<16x16xf32>
    %cst_30 = arith.constant dense<0.000000e+00> : vector<16xf32>
    %94 = vector.multi_reduction <add>, %93, %cst_30 [1] : vector<16x16xf32> to vector<16xf32>
    %95 = vector.shape_cast %94 : vector<16xf32> to vector<16x1xf32>
    %96 = tpu.reciprocal %95 {approx = true} : vector<16x1xf32> -> vector<16x1xf32>
    %97 = vector.broadcast %96 : vector<16x1xf32> to vector<16x16xf32>
    %98 = arith.mulf %93, %97 : vector<16x16xf32>
    %99 = arith.truncf %98 : vector<16x16xf32> to vector<16x16xbf16>
    %cst_31 = arith.constant dense<0.000000e+00> : vector<16x8xf32>
    %100 = tpu.matmul %99, %82, %cst_31 {dimension_numbers = #tpu.dot_dimension_numbers<[1], [0], [0], [1], [0, 0, 1, 1], [], []>} : vector<16x16xbf16>, vector<16x8xbf16>, vector<16x8xf32> -> vector<16x8xf32>
    %101 = arith.truncf %100 : vector<16x8xf32> to vector<16x8xbf16>
    %c0_32 = arith.constant 0 : index
    %c0_33 = arith.constant 0 : index
    %c24 = arith.constant 24 : index
    %102 = vector.load %arg2[%c0_32, %c0_33, %c24] : memref<1x16x32xbf16, #tpu.memory_space<vmem>>, vector<1x16x8xbf16>
    %103 = vector.shape_cast %102 : vector<1x16x8xbf16> to vector<16x8xbf16>
    %104 = vector.shape_cast %101 : vector<16x8xbf16> to vector<1x16x8xbf16>
    tpu.vector_store %arg2[%c0_32, %c0_33, %c24], %104 {strides = array<i32>} : memref<1x16x32xbf16, #tpu.memory_space<vmem>>, vector<1x16x8xbf16>,
    return
  }
  func.func @transform_0(%arg0: i32) -> (i32, i32, i32) {
    %c0_i32 = arith.constant 0 : i32
    %c0_i32_0 = arith.constant 0 : i32
    %c0_i32_1 = arith.constant 0 : i32
    return %arg0, %c0_i32, %c0_i32_0 : i32, i32, i32
  }
  func.func @transform_1(%arg0: i32) -> (i32, i32, i32) {
    %c0_i32 = arith.constant 0 : i32
    %c0_i32_0 = arith.constant 0 : i32
    %c0_i32_1 = arith.constant 0 : i32
    return %arg0, %c0_i32, %c0_i32_0 : i32, i32, i32
  }
}

module attributes {stable_mosaic.version = 11 : i64} {
  func.func @_matmul_bias_kernel(%arg0: i32, %arg1: i32, %arg2: i32, %arg3: memref<32x32xbf16, #tpu.memory_space<vmem>>, %arg4: memref<32x64xbf16, #tpu.memory_space<vmem>>, %arg5: memref<1x64xf32, #tpu.memory_space<vmem>>, %arg6: memref<32x64xbf16, #tpu.memory_space<vmem>>, %arg7: memref<32x64xf32, #tpu.memory_space<vmem>>) attributes {dimension_semantics = [#tpu.dimension_semantics<parallel>, #tpu.dimension_semantics<parallel>, #tpu.dimension_semantics<arbitrary>], iteration_bounds = array<i64: 1, 1, 1>, scalar_prefetch = 0 : i64, scratch_operands = 1 : i64, tpu.core_type = #tpu.core_type<tc>, window_params = [{transform_indices = @transform_0, window_bounds = array<i64: 32, 32>}, {transform_indices = @transform_1, window_bounds = array<i64: 32, 64>}, {transform_indices = @transform_2, window_bounds = array<i64: 1, 64>}, {transform_indices = @transform_3, window_bounds = array<i64: 32, 64>}]} {
    %c0_i32 = arith.constant 0 : i32
    %0 = arith.cmpi eq, %arg2, %c0_i32 : i32
    %1 = arith.extui %0 : i1 to i32
    %c0_i32_0 = arith.constant 0 : i32
    %2 = arith.cmpi ne, %1, %c0_i32_0 : i32
    scf.if %2 {
      %cst_10 = arith.constant 0.000000e+00 : f32
      %12 = vector.broadcast %cst_10 : f32 to vector<32x64xf32>
      %c0_11 = arith.constant 0 : index
      %c0_12 = arith.constant 0 : index
      %13 = vector.load %arg7[%c0_11, %c0_12] : memref<32x64xf32, #tpu.memory_space<vmem>>, vector<32x64xf32>
      tpu.vector_store %arg7[%c0_11, %c0_12], %12 {strides = array<i32>} : memref<32x64xf32, #tpu.memory_space<vmem>>, vector<32x64xf32>,
    } else {
    }
    %c0 = arith.constant 0 : index
    %c0_1 = arith.constant 0 : index
    %3 = vector.load %arg7[%c0, %c0_1] : memref<32x64xf32, #tpu.memory_space<vmem>>, vector<32x64xf32>
    %c0_2 = arith.constant 0 : index
    %c0_3 = arith.constant 0 : index
    %4 = vector.load %arg3[%c0_2, %c0_3] : memref<32x32xbf16, #tpu.memory_space<vmem>>, vector<32x32xbf16>
    %c0_4 = arith.constant 0 : index
    %c0_5 = arith.constant 0 : index
    %5 = vector.load %arg4[%c0_4, %c0_5] : memref<32x64xbf16, #tpu.memory_space<vmem>>, vector<32x64xbf16>
    %cst = arith.constant dense<0.000000e+00> : vector<32x64xf32>
    %6 = tpu.matmul %4, %5, %cst {dimension_numbers = #tpu.dot_dimension_numbers<[1], [0], [0], [1], [0, 0, 1, 1], [], []>} : vector<32x32xbf16>, vector<32x64xbf16>, vector<32x64xf32> -> vector<32x64xf32>
    %7 = arith.addf %3, %6 : vector<32x64xf32>
    %c0_6 = arith.constant 0 : index
    %c0_7 = arith.constant 0 : index
    %8 = vector.load %arg7[%c0_6, %c0_7] : memref<32x64xf32, #tpu.memory_space<vmem>>, vector<32x64xf32>
    tpu.vector_store %arg7[%c0_6, %c0_7], %7 {strides = array<i32>} : memref<32x64xf32, #tpu.memory_space<vmem>>, vector<32x64xf32>,
    %c0_i32_8 = arith.constant 0 : i32
    %9 = arith.cmpi eq, %arg2, %c0_i32_8 : i32
    %10 = arith.extui %9 : i1 to i32
    %c0_i32_9 = arith.constant 0 : i32
    %11 = arith.cmpi ne, %10, %c0_i32_9 : i32
    scf.if %11 {
      %c0_10 = arith.constant 0 : index
      %c0_11 = arith.constant 0 : index
      %12 = vector.load %arg7[%c0_10, %c0_11] : memref<32x64xf32, #tpu.memory_space<vmem>>, vector<32x64xf32>
      %c0_12 = arith.constant 0 : index
      %c0_13 = arith.constant 0 : index
      %13 = vector.load %arg5[%c0_12, %c0_13] : memref<1x64xf32, #tpu.memory_space<vmem>>, vector<1x64xf32>
      %14 = vector.broadcast %13 : vector<1x64xf32> to vector<32x64xf32>
      %15 = arith.addf %12, %14 : vector<32x64xf32>
      %16 = arith.mulf %15, %15 : vector<32x64xf32>
      %17 = arith.mulf %15, %16 : vector<32x64xf32>
      %cst_14 = arith.constant 4.471500e-02 : f32
      %18 = vector.broadcast %cst_14 : f32 to vector<32x64xf32>
      %19 = arith.mulf %18, %17 : vector<32x64xf32>
      %20 = arith.addf %15, %19 : vector<32x64xf32>
      %cst_15 = arith.constant 0.797884583 : f32
      %21 = vector.broadcast %cst_15 : f32 to vector<32x64xf32>
      %22 = arith.mulf %21, %20 : vector<32x64xf32>
      %23 = math.tanh %22 : vector<32x64xf32>
      %cst_16 = arith.constant 1.000000e+00 : f32
      %24 = vector.broadcast %cst_16 : f32 to vector<32x64xf32>
      %25 = arith.addf %24, %23 : vector<32x64xf32>
      %cst_17 = arith.constant 5.000000e-01 : f32
      %26 = vector.broadcast %cst_17 : f32 to vector<32x64xf32>
      %27 = arith.mulf %26, %25 : vector<32x64xf32>
      %28 = arith.mulf %15, %27 : vector<32x64xf32>
      %29 = arith.truncf %28 : vector<32x64xf32> to vector<32x64xbf16>
      %c0_18 = arith.constant 0 : index
      %c0_19 = arith.constant 0 : index
      %30 = vector.load %arg6[%c0_18, %c0_19] : memref<32x64xbf16, #tpu.memory_space<vmem>>, vector<32x64xbf16>
      tpu.vector_store %arg6[%c0_18, %c0_19], %29 {strides = array<i32>} : memref<32x64xbf16, #tpu.memory_space<vmem>>, vector<32x64xbf16>,
    } else {
    }
    return
  }
  func.func @transform_0(%arg0: i32, %arg1: i32, %arg2: i32) -> (i32, i32) {
    %c0_i32 = arith.constant 0 : i32
    return %arg0, %arg2 : i32, i32
  }
  func.func @transform_1(%arg0: i32, %arg1: i32, %arg2: i32) -> (i32, i32) {
    %c0_i32 = arith.constant 0 : i32
    return %arg2, %arg1 : i32, i32
  }
  func.func @transform_2(%arg0: i32, %arg1: i32, %arg2: i32) -> (i32, i32) {
    %c0_i32 = arith.constant 0 : i32
    %c0_i32_0 = arith.constant 0 : i32
    return %c0_i32, %arg1 : i32, i32
  }
  func.func @transform_3(%arg0: i32, %arg1: i32, %arg2: i32) -> (i32, i32) {
    %c0_i32 = arith.constant 0 : i32
    return %arg0, %arg1 : i32, i32
  }
}

module attributes {stable_mosaic.version = 11 : i64} {
  func.func @_matmul_bias_add_ln_kernel(%arg0: i32, %arg1: i32, %arg2: i32, %arg3: memref<32x64xbf16, #tpu.memory_space<vmem>>, %arg4: memref<64x32xbf16, #tpu.memory_space<vmem>>, %arg5: memref<1x32xf32, #tpu.memory_space<vmem>>, %arg6: memref<32x32xbf16, #tpu.memory_space<vmem>>, %arg7: memref<1x32xf32, #tpu.memory_space<vmem>>, %arg8: memref<1x32xf32, #tpu.memory_space<vmem>>, %arg9: memref<32x32xbf16, #tpu.memory_space<vmem>>, %arg10: memref<32x32xf32, #tpu.memory_space<vmem>>) attributes {dimension_semantics = [#tpu.dimension_semantics<parallel>, #tpu.dimension_semantics<parallel>, #tpu.dimension_semantics<arbitrary>], iteration_bounds = array<i64: 1, 1, 1>, scalar_prefetch = 0 : i64, scratch_operands = 1 : i64, tpu.core_type = #tpu.core_type<tc>, window_params = [{transform_indices = @transform_0, window_bounds = array<i64: 32, 64>}, {transform_indices = @transform_1, window_bounds = array<i64: 64, 32>}, {pipeline_mode = #tpu.pipeline_mode<synchronous>, transform_indices = @transform_2, window_bounds = array<i64: 1, 32>}, {transform_indices = @transform_3, window_bounds = array<i64: 32, 32>}, {pipeline_mode = #tpu.pipeline_mode<synchronous>, transform_indices = @transform_4, window_bounds = array<i64: 1, 32>}, {pipeline_mode = #tpu.pipeline_mode<synchronous>, transform_indices = @transform_5, window_bounds = array<i64: 1, 32>}, {transform_indices = @transform_6, window_bounds = array<i64: 32, 32>}]} {
    %c0_i32 = arith.constant 0 : i32
    %0 = arith.cmpi eq, %arg2, %c0_i32 : i32
    %1 = arith.extui %0 : i1 to i32
    %c0_i32_0 = arith.constant 0 : i32
    %2 = arith.cmpi ne, %1, %c0_i32_0 : i32
    scf.if %2 {
      %cst_10 = arith.constant 0.000000e+00 : f32
      %12 = vector.broadcast %cst_10 : f32 to vector<32x32xf32>
      %c0_11 = arith.constant 0 : index
      %c0_12 = arith.constant 0 : index
      %13 = vector.load %arg10[%c0_11, %c0_12] : memref<32x32xf32, #tpu.memory_space<vmem>>, vector<32x32xf32>
      tpu.vector_store %arg10[%c0_11, %c0_12], %12 {strides = array<i32>} : memref<32x32xf32, #tpu.memory_space<vmem>>, vector<32x32xf32>,
    } else {
    }
    %c0 = arith.constant 0 : index
    %c0_1 = arith.constant 0 : index
    %3 = vector.load %arg10[%c0, %c0_1] : memref<32x32xf32, #tpu.memory_space<vmem>>, vector<32x32xf32>
    %c0_2 = arith.constant 0 : index
    %c0_3 = arith.constant 0 : index
    %4 = vector.load %arg3[%c0_2, %c0_3] : memref<32x64xbf16, #tpu.memory_space<vmem>>, vector<32x64xbf16>
    %c0_4 = arith.constant 0 : index
    %c0_5 = arith.constant 0 : index
    %5 = vector.load %arg4[%c0_4, %c0_5] : memref<64x32xbf16, #tpu.memory_space<vmem>>, vector<64x32xbf16>
    %cst = arith.constant dense<0.000000e+00> : vector<32x32xf32>
    %6 = tpu.matmul %4, %5, %cst {dimension_numbers = #tpu.dot_dimension_numbers<[1], [0], [0], [1], [0, 0, 1, 1], [], []>} : vector<32x64xbf16>, vector<64x32xbf16>, vector<32x32xf32> -> vector<32x32xf32>
    %7 = arith.addf %3, %6 : vector<32x32xf32>
    %c0_6 = arith.constant 0 : index
    %c0_7 = arith.constant 0 : index
    %8 = vector.load %arg10[%c0_6, %c0_7] : memref<32x32xf32, #tpu.memory_space<vmem>>, vector<32x32xf32>
    tpu.vector_store %arg10[%c0_6, %c0_7], %7 {strides = array<i32>} : memref<32x32xf32, #tpu.memory_space<vmem>>, vector<32x32xf32>,
    %c0_i32_8 = arith.constant 0 : i32
    %9 = arith.cmpi eq, %arg2, %c0_i32_8 : i32
    %10 = arith.extui %9 : i1 to i32
    %c0_i32_9 = arith.constant 0 : i32
    %11 = arith.cmpi ne, %10, %c0_i32_9 : i32
    scf.if %11 {
      %c0_10 = arith.constant 0 : index
      %c0_11 = arith.constant 0 : index
      %12 = vector.load %arg10[%c0_10, %c0_11] : memref<32x32xf32, #tpu.memory_space<vmem>>, vector<32x32xf32>
      %c0_12 = arith.constant 0 : index
      %c0_13 = arith.constant 0 : index
      %13 = vector.load %arg5[%c0_12, %c0_13] : memref<1x32xf32, #tpu.memory_space<vmem>>, vector<1x32xf32>
      %14 = vector.broadcast %13 : vector<1x32xf32> to vector<32x32xf32>
      %15 = arith.addf %12, %14 : vector<32x32xf32>
      %c0_14 = arith.constant 0 : index
      %c0_15 = arith.constant 0 : index
      %16 = vector.load %arg6[%c0_14, %c0_15] : memref<32x32xbf16, #tpu.memory_space<vmem>>, vector<32x32xbf16>
      %17 = arith.extf %16 : vector<32x32xbf16> to vector<32x32xf32>
      %18 = arith.addf %15, %17 : vector<32x32xf32>
      %cst_16 = arith.constant dense<0.000000e+00> : vector<32xf32>
      %19 = vector.multi_reduction <add>, %18, %cst_16 [1] : vector<32x32xf32> to vector<32xf32>
      %20 = vector.shape_cast %19 : vector<32xf32> to vector<32x1xf32>
      %cst_17 = arith.constant 3.200000e+01 : f32
      %21 = vector.broadcast %cst_17 : f32 to vector<32x1xf32>
      %22 = arith.divf %20, %21 : vector<32x1xf32>
      %23 = vector.broadcast %22 : vector<32x1xf32> to vector<32x32xf32>
      %24 = arith.subf %18, %23 : vector<32x32xf32>
      %25 = arith.mulf %24, %24 : vector<32x32xf32>
      %cst_18 = arith.constant dense<0.000000e+00> : vector<32xf32>
      %26 = vector.multi_reduction <add>, %25, %cst_18 [1] : vector<32x32xf32> to vector<32xf32>
      %27 = vector.shape_cast %26 : vector<32xf32> to vector<32x1xf32>
      %cst_19 = arith.constant 3.200000e+01 : f32
      %28 = vector.broadcast %cst_19 : f32 to vector<32x1xf32>
      %29 = arith.divf %27, %28 : vector<32x1xf32>
      %30 = vector.broadcast %22 : vector<32x1xf32> to vector<32x32xf32>
      %31 = arith.subf %18, %30 : vector<32x32xf32>
      %cst_20 = arith.constant 9.99999974E-6 : f32
      %32 = vector.broadcast %cst_20 : f32 to vector<32x1xf32>
      %33 = arith.addf %29, %32 : vector<32x1xf32>
      %34 = math.rsqrt %33 : vector<32x1xf32>
      %35 = vector.broadcast %34 : vector<32x1xf32> to vector<32x32xf32>
      %36 = arith.mulf %31, %35 : vector<32x32xf32>
      %c0_21 = arith.constant 0 : index
      %c0_22 = arith.constant 0 : index
      %37 = vector.load %arg7[%c0_21, %c0_22] : memref<1x32xf32, #tpu.memory_space<vmem>>, vector<1x32xf32>
      %38 = vector.broadcast %37 : vector<1x32xf32> to vector<32x32xf32>
      %39 = arith.mulf %36, %38 : vector<32x32xf32>
      %c0_23 = arith.constant 0 : index
      %c0_24 = arith.constant 0 : index
      %40 = vector.load %arg8[%c0_23, %c0_24] : memref<1x32xf32, #tpu.memory_space<vmem>>, vector<1x32xf32>
      %41 = vector.broadcast %40 : vector<1x32xf32> to vector<32x32xf32>
      %42 = arith.addf %39, %41 : vector<32x32xf32>
      %43 = arith.truncf %42 : vector<32x32xf32> to vector<32x32xbf16>
      %c0_25 = arith.constant 0 : index
      %c0_26 = arith.constant 0 : index
      %44 = vector.load %arg9[%c0_25, %c0_26] : memref<32x32xbf16, #tpu.memory_space<vmem>>, vector<32x32xbf16>
      tpu.vector_store %arg9[%c0_25, %c0_26], %43 {strides = array<i32>} : memref<32x32xbf16, #tpu.memory_space<vmem>>, vector<32x32xbf16>,
    } else {
    }
    return
  }
  func.func @transform_0(%arg0: i32, %arg1: i32, %arg2: i32) -> (i32, i32) {
    %c0_i32 = arith.constant 0 : i32
    return %arg0, %arg2 : i32, i32
  }
  func.func @transform_1(%arg0: i32, %arg1: i32, %arg2: i32) -> (i32, i32) {
    %c0_i32 = arith.constant 0 : i32
    %c0_i32_0 = arith.constant 0 : i32
    return %arg2, %c0_i32 : i32, i32
  }
  func.func @transform_2(%arg0: i32, %arg1: i32, %arg2: i32) -> (i32, i32) {
    %c0_i32 = arith.constant 0 : i32
    %c0_i32_0 = arith.constant 0 : i32
    %c0_i32_1 = arith.constant 0 : i32
    return %c0_i32, %c0_i32_0 : i32, i32
  }
  func.func @transform_3(%arg0: i32, %arg1: i32, %arg2: i32) -> (i32, i32) {
    %c0_i32 = arith.constant 0 : i32
    %c0_i32_0 = arith.constant 0 : i32
    return %arg0, %c0_i32 : i32, i32
  }
  func.func @transform_4(%arg0: i32, %arg1: i32, %arg2: i32) -> (i32, i32) {
    %c0_i32 = arith.constant 0 : i32
    %c0_i32_0 = arith.constant 0 : i32
    %c0_i32_1 = arith.constant 0 : i32
    return %c0_i32, %c0_i32_0 : i32, i32
  }
  func.func @transform_5(%arg0: i32, %arg1: i32, %arg2: i32) -> (i32, i32) {
    %c0_i32 = arith.constant 0 : i32
    %c0_i32_0 = arith.constant 0 : i32
    %c0_i32_1 = arith.constant 0 : i32
    return %c0_i32, %c0_i32_0 : i32, i32
  }
  func.func @transform_6(%arg0: i32, %arg1: i32, %arg2: i32) -> (i32, i32) {
    %c0_i32 = arith.constant 0 : i32
    %c0_i32_0 = arith.constant 0 : i32
    return %arg0, %c0_i32 : i32, i32
  }
}

</mosaic_0001>

<llo_original>
// kernel: dtrocr_forward.12
$region0: #{dtrocr_forward.12}
  #allocation0 [shape = 'u32[]', space=smem, size = 0x4, offset = 0x4, fixed_abs, tag = 'smem constant byte address 0x4 - core index']
  #allocation1 [shape = 'u32[72,128]{1,0:T(1,128)}', space=vmem, size = 0x9000, scoped, tag = 'internal scratch']
  #allocation2 [shape = 'f32[32,96]{1,0:T(8,128)}', space=vmem, size = 0x4000, scoped, tag = 'scratch operand']
  %s0 = inlined_call_operand.vmem [shape: bf16[32,32], index: 0, kind: input, shape index: {}]
  %s1 = inlined_call_operand.vmem [shape: bf16[32,96], index: 1, kind: input, shape index: {}]
  %s2 = inlined_call_operand.vmem [shape: f32[1,96], index: 2, kind: input, shape index: {}]
  %s3 = inlined_call_operand.vmem [shape: bf16[32,96], index: 3, kind: output, shape index: {}]
  %s4 = sld [smem:[#allocation0]]
  $region30: #{dtrocr_forward.12} parent=0
    _
  %s6 = ssub.s32 1, %s4
  %s7 = scalar_select 0, %s6, %s4
  // Predicated region
  $region2: #{dtrocr_forward.12} parent=0 // pred_check
    _
  $region3: #{dtrocr_forward.12} parent=0 // pred_check_branch
    %9 = sbr.rel (0) target = $region5
  $region4: #{dtrocr_forward.12} parent=0 // pred_region
    _
  $region5: #{dtrocr_forward.12} parent=0 // pred_fallthru
    _
  // Predicated region
  $region6: #{dtrocr_forward.12} parent=0 // pred_check
    _
  $region7: #{dtrocr_forward.12} parent=0 // pred_check_branch
    %11 = sbr.rel (0) target = $region9
  $region8: #{dtrocr_forward.12} parent=0 // pred_region
    _
  $region9: #{dtrocr_forward.12} parent=0 // pred_fallthru
    _
  // Predicated region
  $region10: #{dtrocr_forward.12} parent=0 // pred_check
    _
  $region11: #{dtrocr_forward.12} parent=0 // pred_check_branch
    %13 = sbr.rel (0) target = $region13
  $region12: #{dtrocr_forward.12} parent=0 // pred_region
    _
  $region13: #{dtrocr_forward.12} parent=0 // pred_fallthru
    _
  %p15 = scmp.eq.s32.totalorder 0, 0
  // Predicated region
  $region14: #{dtrocr_forward.12} parent=0 // pred_check
    %p16 = pneg %p15
  $region15: #{dtrocr_forward.12} parent=0 // pred_check_branch
    %18 = sbr.rel (%p16) target = $region17
  $region16: #{dtrocr_forward.12} parent=0 // pred_region
    %vm19 = vcmask 785408
    %20 = vst.msk [vmem:[#allocation2] sm:$0xff] %vm19, 0.0
    %21 = vst.msk [vmem:[#allocation2 + $0x8] sm:$0xff] %vm19, 0.0
    %22 = vst.msk [vmem:[#allocation2 + $0x10] sm:$0xff] %vm19, 0.0
    %23 = vst.msk [vmem:[#allocation2 + $0x18] sm:$0xff] %vm19, 0.0
  $region17: #{dtrocr_forward.12} parent=0 // pred_fallthru
    _
  %v24 = vld [vmem:[#allocation2] sm:$0xff]
  %v25 = vld [vmem:[#allocation2 + $0x8] sm:$0xff]
  %v26 = vld [vmem:[#allocation2 + $0x10] sm:$0xff]
  %v27 = vld [vmem:[#allocation2 + $0x18] sm:$0xff]
  %v28 = vld [vmem:[%s0] sm:$0xf]
  %v29 = vld [vmem:[%s0 + $0x4] sm:$0xf]
  %v30 = vld [vmem:[%s0 + $0x8] sm:$0xf]
  %v31 = vld [vmem:[%s0 + $0xc] sm:$0xf]
  %v32 = vld [vmem:[%s1] sm:$0xf]
  %v33 = vld [vmem:[%s1 + $0x4] sm:$0xf]
  %v34 = vld [vmem:[%s1 + $0x8] sm:$0xf]
  %v35 = vld [vmem:[%s1 + $0xc] sm:$0xf]
  %v40 = vunpack.c.l.b16 %v28
  %v41 = vunpack.c.l.b16 %v29
  %v42 = vunpack.c.l.b16 %v30
  %v43 = vunpack.c.l.b16 %v31
  %v44 = vpack.c.b16 %v41, %v40
  %v45 = vpack.c.b16 %v43, %v42
  %v50 = vunpack.c.l.b16 %v32
  %v51 = vunpack.c.l.b16 %v33
  %v52 = vunpack.c.l.b16 %v34
  %v53 = vunpack.c.l.b16 %v35
  %v54 = vpack.c.b16 %v51, %v50
  %v55 = vpack.c.b16 %v53, %v52
  %vm58 = vcmask 261120
  %v60 = vsel %vm58, %v44, 0
  %v63 = vsel %vm58, %v45, 0
  %65 = vmatpush.bf16.msra.mxu0 0
  %66 = vmatpush.bf16.msra.mxu0 0
  %67 = vmatpush.bf16.msra.mxu0 0
  %68 = vmatpush.bf16.msra.mxu0 0
  %69 = vmatpush.bf16.msra.mxu0 0
  %70 = vmatpush.bf16.msra.mxu0 0
  %71 = vmatpush.bf16.msra.mxu0 %v55
  %72 = vmatpush.bf16.msra.mxu0 %v54
  %73 = vmatmul.bf16.gmra.mxu0 %v60
  %v74 = vpop.f32.mrf.mxu0
  %v75 = vadd.f32 0.0, %v74
  %v76 = vpop.f32.mrf.mxu0
  %v77 = vadd.f32 0.0, %v76
  %78 = vmatmul.bf16.gmra.mxu0 %v63
  %v79 = vpop.f32.mrf.mxu0
  %v80 = vadd.f32 0.0, %v79
  %v81 = vpop.f32.mrf.mxu0
  %v82 = vadd.f32 0.0, %v81
  %83 = vdwg.mxu0
  %v84 = vadd.f32 %v24, %v75
  %v85 = vadd.f32 %v25, %v77
  %v86 = vadd.f32 %v26, %v80
  %v87 = vadd.f32 %v27, %v82
  %vm88 = vcmask 785408
  %89 = vst.msk [vmem:[#allocation2] sm:$0xff] %vm88, %v84
  %90 = vst.msk [vmem:[#allocation2 + $0x8] sm:$0xff] %vm88, %v85
  %91 = vst.msk [vmem:[#allocation2 + $0x10] sm:$0xff] %vm88, %v86
  %92 = vst.msk [vmem:[#allocation2 + $0x18] sm:$0xff] %vm88, %v87
  // Predicated region
  $region18: #{dtrocr_forward.12} parent=0 // pred_check
    %p93 = pneg %p15
  $region19: #{dtrocr_forward.12} parent=0 // pred_check_branch
    %95 = sbr.rel (%p93) target = $region21
  $region20: #{dtrocr_forward.12} parent=0 // pred_region
    %v96 = vld [vmem:[#allocation2] sm:$0xff]
    %v97 = vld [vmem:[#allocation2 + $0x8] sm:$0xff]
    %v98 = vld [vmem:[#allocation2 + $0x10] sm:$0xff]
    %v99 = vld [vmem:[#allocation2 + $0x18] sm:$0xff]
    %v100 = vld [vmem:[%s2] sm:$0x1]
    %v102 = vperm.slane %v100, 0
    %v104 = vadd.f32 %v96, %v102
    %v105 = vadd.f32 %v97, %v102
    %v106 = vadd.f32 %v98, %v102
    %v107 = vadd.f32 %v99, %v102
    %v108 = vpack.c.bf16 %v104, %v104
    %v109 = vpack.c.bf16 %v105, %v105
    %v110 = vpack.c.bf16 %v106, %v106
    %v111 = vpack.c.bf16 %v107, %v107
    %vm112 = vcmask 781312
    %113 = vst.msk [vmem:[%s3] sm:$0xf] %vm112, %v108
    %114 = vst.msk [vmem:[%s3 + $0x4] sm:$0xf] %vm112, %v109
    %115 = vst.msk [vmem:[%s3 + $0x8] sm:$0xf] %vm112, %v110
    %116 = vst.msk [vmem:[%s3 + $0xc] sm:$0xf] %vm112, %v111
  $region21: #{dtrocr_forward.12} parent=0 // pred_fallthru
    _
  // Predicated region
  $region22: #{dtrocr_forward.12} parent=0 // pred_check
    _
  $region23: #{dtrocr_forward.12} parent=0 // pred_check_branch
    %118 = sbr.rel (0) target = $region25
  $region24: #{dtrocr_forward.12} parent=0 // pred_region
    _
  $region25: #{dtrocr_forward.12} parent=0 // pred_fallthru
    _
  // Predicated region
  $region26: #{dtrocr_forward.12} parent=0 // pred_check
    _
  $region27: #{dtrocr_forward.12} parent=0 // pred_check_branch
    %120 = sbr.rel (0) target = $region29
  $region28: #{dtrocr_forward.12} parent=0 // pred_region
    _
  $region29: #{dtrocr_forward.12} parent=0 // pred_fallthru
    _

// kernel: dtrocr_forward.14
$region0: #{dtrocr_forward.14}
  #allocation0 [shape = 'u32[]', space=smem, size = 0x4, offset = 0x4, fixed_abs, tag = 'smem constant byte address 0x4 - core index']
  #allocation1 [shape = 'u32[72,128]{1,0:T(1,128)}', space=vmem, size = 0x9000, scoped, tag = 'internal scratch']
  #allocation2 [shape = 'f32[32,32]{1,0:T(8,128)}', space=vmem, size = 0x4000, scoped, tag = 'scratch operand']
  %s0 = inlined_call_operand.vmem [shape: bf16[32,32], index: 0, kind: input, shape index: {}]
  %s1 = inlined_call_operand.vmem [shape: bf16[32,32], index: 1, kind: input, shape index: {}]
  %s2 = inlined_call_operand.vmem [shape: f32[1,32], index: 2, kind: input, shape index: {}]
  %s3 = inlined_call_operand.vmem [shape: bf16[32,32], index: 3, kind: input, shape index: {}]
  %s4 = inlined_call_operand.vmem [shape: f32[1,32], index: 4, kind: input, shape index: {}]
  %s5 = inlined_call_operand.vmem [shape: f32[1,32], index: 5, kind: input, shape index: {}]
  %s6 = inlined_call_operand.vmem [shape: bf16[32,32], index: 6, kind: output, shape index: {}]
  %s7 = sld [smem:[#allocation0]]
  $region42: #{dtrocr_forward.14} parent=0
    _
  %s9 = ssub.s32 1, %s7
  %s10 = scalar_select 0, %s9, %s7
  // Predicated region
  $region2: #{dtrocr_forward.14} parent=0 // pred_check
    _
  $region3: #{dtrocr_forward.14} parent=0 // pred_check_branch
    %12 = sbr.rel (0) target = $region5
  $region4: #{dtrocr_forward.14} parent=0 // pred_region
    _
  $region5: #{dtrocr_forward.14} parent=0 // pred_fallthru
    _
  // Predicated region
  $region6: #{dtrocr_forward.14} parent=0 // pred_check
    _
  $region7: #{dtrocr_forward.14} parent=0 // pred_check_branch
    %14 = sbr.rel (0) target = $region9
  $region8: #{dtrocr_forward.14} parent=0 // pred_region
    _
  $region9: #{dtrocr_forward.14} parent=0 // pred_fallthru
    _
  // Predicated region
  $region10: #{dtrocr_forward.14} parent=0 // pred_check
    _
  $region11: #{dtrocr_forward.14} parent=0 // pred_check_branch
    %16 = sbr.rel (0) target = $region13
  $region12: #{dtrocr_forward.14} parent=0 // pred_region
    _
  $region13: #{dtrocr_forward.14} parent=0 // pred_fallthru
    _
  // Predicated region
  $region14: #{dtrocr_forward.14} parent=0 // pred_check
    _
  $region15: #{dtrocr_forward.14} parent=0 // pred_check_branch
    %18 = sbr.rel (0) target = $region17
  $region16: #{dtrocr_forward.14} parent=0 // pred_region
    _
  $region17: #{dtrocr_forward.14} parent=0 // pred_fallthru
    _
  // Predicated region
  $region18: #{dtrocr_forward.14} parent=0 // pred_check
    _
  $region19: #{dtrocr_forward.14} parent=0 // pred_check_branch
    %20 = sbr.rel (0) target = $region21
  $region20: #{dtrocr_forward.14} parent=0 // pred_region
    _
  $region21: #{dtrocr_forward.14} parent=0 // pred_fallthru
    _
  // Predicated region
  $region22: #{dtrocr_forward.14} parent=0 // pred_check
    _
  $region23: #{dtrocr_forward.14} parent=0 // pred_check_branch
    %22 = sbr.rel (0) target = $region25
  $region24: #{dtrocr_forward.14} parent=0 // pred_region
    _
  $region25: #{dtrocr_forward.14} parent=0 // pred_fallthru
    _
  %p24 = scmp.eq.s32.totalorder 0, 0
  // Predicated region
  $region26: #{dtrocr_forward.14} parent=0 // pred_check
    %p25 = pneg %p24
  $region27: #{dtrocr_forward.14} parent=0 // pred_check_branch
    %27 = sbr.rel (%p25) target = $region29
  $region28: #{dtrocr_forward.14} parent=0 // pred_region
    %vm28 = vcmask 261120
    %29 = vst.msk [vmem:[#allocation2] sm:$0xff] %vm28, 0.0
    %30 = vst.msk [vmem:[#allocation2 + $0x8] sm:$0xff] %vm28, 0.0
    %31 = vst.msk [vmem:[#allocation2 + $0x10] sm:$0xff] %vm28, 0.0
    %32 = vst.msk [vmem:[#allocation2 + $0x18] sm:$0xff] %vm28, 0.0
  $region29: #{dtrocr_forward.14} parent=0 // pred_fallthru
    _
  %v33 = vld [vmem:[#allocation2] sm:$0xff]
  %v34 = vld [vmem:[#allocation2 + $0x8] sm:$0xff]
  %v35 = vld [vmem:[#allocation2 + $0x10] sm:$0xff]
  %v36 = vld [vmem:[#allocation2 + $0x18] sm:$0xff]
  %v37 = vld [vmem:[%s0] sm:$0xf]
  %v38 = vld [vmem:[%s0 + $0x4] sm:$0xf]
  %v39 = vld [vmem:[%s0 + $0x8] sm:$0xf]
  %v40 = vld [vmem:[%s0 + $0xc] sm:$0xf]
  %v41 = vld [vmem:[%s1] sm:$0xf]
  %v42 = vld [vmem:[%s1 + $0x4] sm:$0xf]
  %v43 = vld [vmem:[%s1 + $0x8] sm:$0xf]
  %v44 = vld [vmem:[%s1 + $0xc] sm:$0xf]
  %v49 = vunpack.c.l.b16 %v37
  %v50 = vunpack.c.l.b16 %v38
  %v51 = vunpack.c.l.b16 %v39
  %v52 = vunpack.c.l.b16 %v40
  %v53 = vpack.c.b16 %v50, %v49
  %v54 = vpack.c.b16 %v52, %v51
  %v59 = vunpack.c.l.b16 %v41
  %v60 = vunpack.c.l.b16 %v42
  %v61 = vunpack.c.l.b16 %v43
  %v62 = vunpack.c.l.b16 %v44
  %v63 = vpack.c.b16 %v60, %v59
  %v64 = vpack.c.b16 %v62, %v61
  %vm67 = vcmask 261120
  %v69 = vsel %vm67, %v53, 0
  %v72 = vsel %vm67, %v54, 0
  %74 = vmatpush.bf16.msra.mxu0 0
  %75 = vmatpush.bf16.msra.mxu0 0
  %76 = vmatpush.bf16.msra.mxu0 0
  %77 = vmatpush.bf16.msra.mxu0 0
  %78 = vmatpush.bf16.msra.mxu0 0
  %79 = vmatpush.bf16.msra.mxu0 0
  %80 = vmatpush.bf16.msra.mxu0 %v64
  %81 = vmatpush.bf16.msra.mxu0 %v63
  %82 = vmatmul.bf16.gmra.mxu0 %v69
  %v83 = vpop.f32.mrf.mxu0
  %v84 = vadd.f32 0.0, %v83
  %v85 = vpop.f32.mrf.mxu0
  %v86 = vadd.f32 0.0, %v85
  %87 = vmatmul.bf16.gmra.mxu0 %v72
  %v88 = vpop.f32.mrf.mxu0
  %v89 = vadd.f32 0.0, %v88
  %v90 = vpop.f32.mrf.mxu0
  %v91 = vadd.f32 0.0, %v90
  %92 = vdwg.mxu0
  %v93 = vadd.f32 %v33, %v84
  %v94 = vadd.f32 %v34, %v86
  %v95 = vadd.f32 %v35, %v89
  %v96 = vadd.f32 %v36, %v91
  %97 = vst.msk [vmem:[#allocation2] sm:$0xff] %vm67, %v93
  %98 = vst.msk [vmem:[#allocation2 + $0x8] sm:$0xff] %vm67, %v94
  %99 = vst.msk [vmem:[#allocation2 + $0x10] sm:$0xff] %vm67, %v95
  %100 = vst.msk [vmem:[#allocation2 + $0x18] sm:$0xff] %vm67, %v96
  // Predicated region
  $region30: #{dtrocr_forward.14} parent=0 // pred_check
    %p101 = pneg %p24
  $region31: #{dtrocr_forward.14} parent=0 // pred_check_branch
    %103 = sbr.rel (%p101) target = $region33
  $region32: #{dtrocr_forward.14} parent=0 // pred_region
    %v104 = vld [vmem:[#allocation2] sm:$0xff]
    %v105 = vld [vmem:[#allocation2 + $0x8] sm:$0xff]
    %v106 = vld [vmem:[#allocation2 + $0x10] sm:$0xff]
    %v107 = vld [vmem:[#allocation2 + $0x18] sm:$0xff]
    %v108 = vld [vmem:[%s2] sm:$0x1]
    %v110 = vperm.slane %v108, 0
    %v112 = vadd.f32 %v104, %v110
    %v113 = vadd.f32 %v105, %v110
    %v114 = vadd.f32 %v106, %v110
    %v115 = vadd.f32 %v107, %v110
    %v116 = vld [vmem:[%s3] sm:$0xf]
    %v117 = vld [vmem:[%s3 + $0x4] sm:$0xf]
    %v118 = vld [vmem:[%s3 + $0x8] sm:$0xf]
    %v119 = vld [vmem:[%s3 + $0xc] sm:$0xf]
    %v120 = vunpack.c.l.bf16 %v116
    %v121 = vunpack.c.l.bf16 %v117
    %v122 = vunpack.c.l.bf16 %v118
    %v123 = vunpack.c.l.bf16 %v119
    %v124 = vadd.f32 %v112, %v120
    %v125 = vadd.f32 %v113, %v121
    %v126 = vadd.f32 %v114, %v122
    %v127 = vadd.f32 %v115, %v123
    %v128 = vsel %vm67, %v124, 0.0
    %129 = vadd.xlane.f32.xlu0 %v128
    %v130 = vpop.xlane.xlu0 %129
    %v131 = vsel %vm67, %v125, 0.0
    %132 = vadd.xlane.f32.xlu0 %v131
    %v133 = vpop.xlane.xlu0 %132
    %v134 = vsel %vm67, %v126, 0.0
    %135 = vadd.xlane.f32.xlu0 %v134
    %v136 = vpop.xlane.xlu0 %135
    %v137 = vsel %vm67, %v127, 0.0
    %138 = vadd.xlane.f32.xlu0 %v137
    %v139 = vpop.xlane.xlu0 %138
    %v140 = vrcp.pop 32.0
    %v141 = vmul.f32 32.0, %v140
    %v142 = vsub.f32 1.0, %v141
    %v143 = vmul.f32 %v140, %v142
    %v144 = vadd.f32 %v140, %v143
    %vm145 = vweird.f32 %v140
    %v146 = vsel %vm145, %v140, %v144
    %v147 = vmul.f32 %v130, %v146
    %v148 = vmul.f32 %v133, %v146
    %v149 = vmul.f32 %v136, %v146
    %v150 = vmul.f32 %v139, %v146
    %v151 = vsub.f32 %v124, %v147
    %v152 = vsub.f32 %v125, %v148
    %v153 = vsub.f32 %v126, %v149
    %v154 = vsub.f32 %v127, %v150
    %v155 = vmul.f32 %v151, %v151
    %v156 = vmul.f32 %v152, %v152
    %v157 = vmul.f32 %v153, %v153
    %v158 = vmul.f32 %v154, %v154
    %v159 = vsel %vm67, %v155, 0.0
    %160 = vadd.xlane.f32.xlu0 %v159
    %v161 = vpop.xlane.xlu0 %160
    %v162 = vsel %vm67, %v156, 0.0
    %163 = vadd.xlane.f32.xlu0 %v162
    %v164 = vpop.xlane.xlu0 %163
    %v165 = vsel %vm67, %v157, 0.0
    %166 = vadd.xlane.f32.xlu0 %v165
    %v167 = vpop.xlane.xlu0 %166
    %v168 = vsel %vm67, %v158, 0.0
    %169 = vadd.xlane.f32.xlu0 %v168
    %v170 = vpop.xlane.xlu0 %169
    %v171 = vmul.f32 %v161, %v146
    %v172 = vmul.f32 %v164, %v146
    %v173 = vmul.f32 %v167, %v146
    %v174 = vmul.f32 %v170, %v146
    %v175 = vadd.f32 %v171, 1e-05
    %v176 = vadd.f32 %v172, 1e-05
    %v177 = vadd.f32 %v173, 1e-05
    %v178 = vadd.f32 %v174, 1e-05
    %v179 = vrsqrt.pop %v175
    %v180 = vmul.f32 %v179, %v175
    %v181 = vmul.f32 %v180, %v179
    %v182 = vmul.f32 0.5, %v181
    %v183 = vsub.f32 1.5, %v182
    %v184 = vmul.f32 %v179, %v183
    %vm185 = vweird.f32 %v175
    %vm186 = vweird.f32 %v179
    %vm187 = vmor %vm185, %vm186
    %v188 = vsel %vm187, %v179, %v184
    %v189 = vrsqrt.pop %v176
    %v190 = vmul.f32 %v189, %v176
    %v191 = vmul.f32 %v190, %v189
    %v192 = vmul.f32 0.5, %v191
    %v193 = vsub.f32 1.5, %v192
    %v194 = vmul.f32 %v189, %v193
    %vm195 = vweird.f32 %v176
    %vm196 = vweird.f32 %v189
    %vm197 = vmor %vm195, %vm196
    %v198 = vsel %vm197, %v189, %v194
    %v199 = vrsqrt.pop %v177
    %v200 = vmul.f32 %v199, %v177
    %v201 = vmul.f32 %v200, %v199
    %v202 = vmul.f32 0.5, %v201
    %v203 = vsub.f32 1.5, %v202
    %v204 = vmul.f32 %v199, %v203
    %vm205 = vweird.f32 %v177
    %vm206 = vweird.f32 %v199
    %vm207 = vmor %vm205, %vm206
    %v208 = vsel %vm207, %v199, %v204
    %v209 = vrsqrt.pop %v178
    %v210 = vmul.f32 %v209, %v178
    %v211 = vmul.f32 %v210, %v209
    %v212 = vmul.f32 0.5, %v211
    %v213 = vsub.f32 1.5, %v212
    %v214 = vmul.f32 %v209, %v213
    %vm215 = vweird.f32 %v178
    %vm216 = vweird.f32 %v209
    %vm217 = vmor %vm215, %vm216
    %v218 = vsel %vm217, %v209, %v214
    %v219 = vmul.f32 %v151, %v188
    %v220 = vmul.f32 %v152, %v198
    %v221 = vmul.f32 %v153, %v208
    %v222 = vmul.f32 %v154, %v218
    %v223 = vld [vmem:[%s4] sm:$0x1]
    %v225 = vperm.slane %v223, 0
    %v227 = vmul.f32 %v219, %v225
    %v228 = vmul.f32 %v220, %v225
    %v229 = vmul.f32 %v221, %v225
    %v230 = vmul.f32 %v222, %v225
    %v231 = vld [vmem:[%s5] sm:$0x1]
    %v233 = vperm.slane %v231, 0
    %v235 = vadd.f32 %v227, %v233
    %v236 = vadd.f32 %v228, %v233
    %v237 = vadd.f32 %v229, %v233
    %v238 = vadd.f32 %v230, %v233
    %v239 = vpack.c.bf16 %v235, %v235
    %v240 = vpack.c.bf16 %v236, %v236
    %v241 = vpack.c.bf16 %v237, %v237
    %v242 = vpack.c.bf16 %v238, %v238
    %vm243 = vcmask 257024
    %244 = vst.msk [vmem:[%s6] sm:$0xf] %vm243, %v239
    %245 = vst.msk [vmem:[%s6 + $0x4] sm:$0xf] %vm243, %v240
    %246 = vst.msk [vmem:[%s6 + $0x8] sm:$0xf] %vm243, %v241
    %247 = vst.msk [vmem:[%s6 + $0xc] sm:$0xf] %vm243, %v242
  $region33: #{dtrocr_forward.14} parent=0 // pred_fallthru
    _
  // Predicated region
  $region34: #{dtrocr_forward.14} parent=0 // pred_check
    _
  $region35: #{dtrocr_forward.14} parent=0 // pred_check_branch
    %249 = sbr.rel (0) target = $region37
  $region36: #{dtrocr_forward.14} parent=0 // pred_region
    _
  $region37: #{dtrocr_forward.14} parent=0 // pred_fallthru
    _
  // Predicated region
  $region38: #{dtrocr_forward.14} parent=0 // pred_check
    _
  $region39: #{dtrocr_forward.14} parent=0 // pred_check_branch
    %251 = sbr.rel (0) target = $region41
  $region40: #{dtrocr_forward.14} parent=0 // pred_region
    _
  $region41: #{dtrocr_forward.14} parent=0 // pred_fallthru
    _

// kernel: dtrocr_forward.11
$region0: #{dtrocr_forward.11}
  #allocation0 [shape = 'u32[]', space=smem, size = 0x4, offset = 0x4, fixed_abs, tag = 'smem constant byte address 0x4 - core index']
  #allocation1 [shape = 'u32[72,128]{1,0:T(1,128)}', space=vmem, size = 0x9000, scoped, tag = 'internal scratch']
  #allocation2 [shape = 'f32[32,32]{1,0:T(8,128)}', space=vmem, size = 0x4000, scoped, tag = 'scratch operand']
  %s0 = inlined_call_operand.vmem [shape: bf16[32,48], index: 0, kind: input, shape index: {}]
  %s1 = inlined_call_operand.vmem [shape: bf16[48,32], index: 1, kind: input, shape index: {}]
  %s2 = inlined_call_operand.vmem [shape: f32[1,32], index: 2, kind: input, shape index: {}]
  %s3 = inlined_call_operand.vmem [shape: bf16[32,32], index: 3, kind: output, shape index: {}]
  %s4 = sld [smem:[#allocation0]]
  $region30: #{dtrocr_forward.11} parent=0
    _
  %s6 = ssub.s32 1, %s4
  %s7 = scalar_select 0, %s6, %s4
  // Predicated region
  $region2: #{dtrocr_forward.11} parent=0 // pred_check
    _
  $region3: #{dtrocr_forward.11} parent=0 // pred_check_branch
    %9 = sbr.rel (0) target = $region5
  $region4: #{dtrocr_forward.11} parent=0 // pred_region
    _
  $region5: #{dtrocr_forward.11} parent=0 // pred_fallthru
    _
  // Predicated region
  $region6: #{dtrocr_forward.11} parent=0 // pred_check
    _
  $region7: #{dtrocr_forward.11} parent=0 // pred_check_branch
    %11 = sbr.rel (0) target = $region9
  $region8: #{dtrocr_forward.11} parent=0 // pred_region
    _
  $region9: #{dtrocr_forward.11} parent=0 // pred_fallthru
    _
  // Predicated region
  $region10: #{dtrocr_forward.11} parent=0 // pred_check
    _
  $region11: #{dtrocr_forward.11} parent=0 // pred_check_branch
    %13 = sbr.rel (0) target = $region13
  $region12: #{dtrocr_forward.11} parent=0 // pred_region
    _
  $region13: #{dtrocr_forward.11} parent=0 // pred_fallthru
    _
  %p15 = scmp.eq.s32.totalorder 0, 0
  // Predicated region
  $region14: #{dtrocr_forward.11} parent=0 // pred_check
    %p16 = pneg %p15
  $region15: #{dtrocr_forward.11} parent=0 // pred_check_branch
    %18 = sbr.rel (%p16) target = $region17
  $region16: #{dtrocr_forward.11} parent=0 // pred_region
    %vm19 = vcmask 261120
    %20 = vst.msk [vmem:[#allocation2] sm:$0xff] %vm19, 0.0
    %21 = vst.msk [vmem:[#allocation2 + $0x8] sm:$0xff] %vm19, 0.0
    %22 = vst.msk [vmem:[#allocation2 + $0x10] sm:$0xff] %vm19, 0.0
    %23 = vst.msk [vmem:[#allocation2 + $0x18] sm:$0xff] %vm19, 0.0
  $region17: #{dtrocr_forward.11} parent=0 // pred_fallthru
    _
  %v24 = vld [vmem:[#allocation2] sm:$0xff]
  %v25 = vld [vmem:[#allocation2 + $0x8] sm:$0xff]
  %v26 = vld [vmem:[#allocation2 + $0x10] sm:$0xff]
  %v27 = vld [vmem:[#allocation2 + $0x18] sm:$0xff]
  %v28 = vld [vmem:[%s0] sm:$0xf]
  %v29 = vld [vmem:[%s0 + $0x4] sm:$0xf]
  %v30 = vld [vmem:[%s0 + $0x8] sm:$0xf]
  %v31 = vld [vmem:[%s0 + $0xc] sm:$0xf]
  %v32 = vld [vmem:[%s1] sm:$0xf]
  %v33 = vld [vmem:[%s1 + $0x4] sm:$0xf]
  %v34 = vld [vmem:[%s1 + $0x8] sm:$0xf]
  %v35 = vld [vmem:[%s1 + $0xc] sm:$0xf]
  %v36 = vld [vmem:[%s1 + $0x10] sm:$0xf]
  %v37 = vld [vmem:[%s1 + $0x14] sm:$0xf]
  %v42 = vunpack.c.l.b16 %v28
  %v43 = vunpack.c.l.b16 %v29
  %v44 = vunpack.c.l.b16 %v30
  %v45 = vunpack.c.l.b16 %v31
  %v46 = vpack.c.b16 %v43, %v42
  %v47 = vpack.c.b16 %v45, %v44
  %v54 = vunpack.c.l.b16 %v32
  %v55 = vunpack.c.l.b16 %v33
  %v56 = vunpack.c.l.b16 %v34
  %v57 = vunpack.c.l.b16 %v35
  %v58 = vunpack.c.l.b16 %v36
  %v59 = vunpack.c.l.b16 %v37
  %v60 = vpack.c.b16 %v55, %v54
  %v61 = vpack.c.b16 %v57, %v56
  %v62 = vpack.c.b16 %v59, %v58
  %vm66 = vcmask 392192
  %v68 = vsel %vm66, %v46, 0
  %v71 = vsel %vm66, %v47, 0
  %73 = vmatpush.bf16.msra.mxu0 0
  %74 = vmatpush.bf16.msra.mxu0 0
  %75 = vmatpush.bf16.msra.mxu0 0
  %76 = vmatpush.bf16.msra.mxu0 0
  %77 = vmatpush.bf16.msra.mxu0 0
  %78 = vmatpush.bf16.msra.mxu0 %v62
  %79 = vmatpush.bf16.msra.mxu0 %v61
  %80 = vmatpush.bf16.msra.mxu0 %v60
  %81 = vmatmul.bf16.gmra.mxu0 %v68
  %v82 = vpop.f32.mrf.mxu0
  %v83 = vadd.f32 0.0, %v82
  %v84 = vpop.f32.mrf.mxu0
  %v85 = vadd.f32 0.0, %v84
  %86 = vmatmul.bf16.gmra.mxu0 %v71
  %v87 = vpop.f32.mrf.mxu0
  %v88 = vadd.f32 0.0, %v87
  %v89 = vpop.f32.mrf.mxu0
  %v90 = vadd.f32 0.0, %v89
  %91 = vdwg.mxu0
  %v92 = vadd.f32 %v24, %v83
  %v93 = vadd.f32 %v25, %v85
  %v94 = vadd.f32 %v26, %v88
  %v95 = vadd.f32 %v27, %v90
  %vm96 = vcmask 261120
  %97 = vst.msk [vmem:[#allocation2] sm:$0xff] %vm96, %v92
  %98 = vst.msk [vmem:[#allocation2 + $0x8] sm:$0xff] %vm96, %v93
  %99 = vst.msk [vmem:[#allocation2 + $0x10] sm:$0xff] %vm96, %v94
  %100 = vst.msk [vmem:[#allocation2 + $0x18] sm:$0xff] %vm96, %v95
  // Predicated region
  $region18: #{dtrocr_forward.11} parent=0 // pred_check
    %p101 = pneg %p15
  $region19: #{dtrocr_forward.11} parent=0 // pred_check_branch
    %103 = sbr.rel (%p101) target = $region21
  $region20: #{dtrocr_forward.11} parent=0 // pred_region
    %v104 = vld [vmem:[#allocation2] sm:$0xff]
    %v105 = vld [vmem:[#allocation2 + $0x8] sm:$0xff]
    %v106 = vld [vmem:[#allocation2 + $0x10] sm:$0xff]
    %v107 = vld [vmem:[#allocation2 + $0x18] sm:$0xff]
    %v108 = vld [vmem:[%s2] sm:$0x1]
    %v110 = vperm.slane %v108, 0
    %v112 = vadd.f32 %v104, %v110
    %v113 = vadd.f32 %v105, %v110
    %v114 = vadd.f32 %v106, %v110
    %v115 = vadd.f32 %v107, %v110
    %v116 = vpack.c.bf16 %v112, %v112
    %v117 = vpack.c.bf16 %v113, %v113
    %v118 = vpack.c.bf16 %v114, %v114
    %v119 = vpack.c.bf16 %v115, %v115
    %vm120 = vcmask 257024
    %121 = vst.msk [vmem:[%s3] sm:$0xf] %vm120, %v116
    %122 = vst.msk [vmem:[%s3 + $0x4] sm:$0xf] %vm120, %v117
    %123 = vst.msk [vmem:[%s3 + $0x8] sm:$0xf] %vm120, %v118
    %124 = vst.msk [vmem:[%s3 + $0xc] sm:$0xf] %vm120, %v119
  $region21: #{dtrocr_forward.11} parent=0 // pred_fallthru
    _
  // Predicated region
  $region22: #{dtrocr_forward.11} parent=0 // pred_check
    _
  $region23: #{dtrocr_forward.11} parent=0 // pred_check_branch
    %126 = sbr.rel (0) target = $region25
  $region24: #{dtrocr_forward.11} parent=0 // pred_region
    _
  $region25: #{dtrocr_forward.11} parent=0 // pred_fallthru
    _
  // Predicated region
  $region26: #{dtrocr_forward.11} parent=0 // pred_check
    _
  $region27: #{dtrocr_forward.11} parent=0 // pred_check_branch
    %128 = sbr.rel (0) target = $region29
  $region28: #{dtrocr_forward.11} parent=0 // pred_region
    _
  $region29: #{dtrocr_forward.11} parent=0 // pred_fallthru
    _

// kernel: dtrocr_forward.13
$region0: #{dtrocr_forward.13}
  #allocation0 [shape = 'u32[]', space=smem, size = 0x4, offset = 0x4, fixed_abs, tag = 'smem constant byte address 0x4 - core index']
  #allocation1 [shape = 'u32[72,128]{1,0:T(1,128)}', space=vmem, size = 0x9000, scoped, tag = 'internal scratch']
  %s0 = inlined_call_operand.vmem [shape: bf16[2,16,96], index: 0, kind: input, shape index: {}]
  %s1 = inlined_call_operand.vmem [shape: bf16[2,16,32], index: 1, kind: output, shape index: {}]
  %s2 = sld [smem:[#allocation0]]
  $region37: #{dtrocr_forward.13} parent=0
    _
  %s4 = ssub.s32 1, %s2
  %s5 = scalar_select 0, %s4, %s2
  loop: start=0, step=1, limit=4
  $region2: #{dtrocr_forward.13} parent=0 // loop_pre_header
    _
  $region3: #{dtrocr_forward.13} parent=0 // loop_header
    %s7 = sphi 0, %s11
    %p8 = scmp.ge.s32.totalorder %s7, 4
    %s17 = sphi 0, %s19
    %s20 = sphi 0, %s17
    %s21 = sphi 0, %s20
    %s37 = sphi 0, %s21
    %s43 = sphi 0, %s45
    %s46 = sphi 0, %s43
    %s47 = sphi 0, %s46
    %s63 = sphi 0, %s47
  $region4: #{dtrocr_forward.13} parent=0 // loop_header_branch
    %10 = sbr.rel (%p8) target = $region8
  $region5: #{dtrocr_forward.13} parent=0 // loop_body
    %s12 = ssub.s32 %s7, 1
    %s13 = ssub.s32 %s7, 2
    %s14 = sadd.s32 %s7, 1
    %s15 = ssub.s32 %s7, %s14
    %p16 = scmp.eq.s32.totalorder %s15, 0
    %s18 = sadd.s32 %s17, 1
    %s19 = scalar_select %p16, %s17, %s18
    %p22 = pneg %p16
    %p23 = scmp.eq.s32.totalorder %s7, 1
    %p24 = por %p22, %p23
    %p25 = scmp.ne.s32.totalorder %s17, %s20
    %p26 = scmp.eq.s32.totalorder %s7, 0
    %p27 = por %p25, %p26
    %p28 = scmp.ne.s32.totalorder %s17, %s20
    %p29 = scmp.eq.s32.totalorder %s12, 1
    %p30 = por %p28, %p29
    %p31 = scmp.ne.s32.totalorder %s20, %s21
    %p32 = scmp.eq.s32.totalorder %s12, 0
    %p33 = por %p31, %p32
    %p34 = scmp.ne.s32.totalorder %s20, %s21
    %p35 = scmp.eq.s32.totalorder %s13, 1
    %p36 = por %p34, %p35
    %p38 = scmp.ne.s32.totalorder %s21, %s37
    %p39 = scmp.eq.s32.totalorder %s13, 0
    %p40 = por %p38, %p39
    %s41 = ssub.s32 %s7, %s14
    %p42 = scmp.eq.s32.totalorder %s41, 0
    %s44 = sadd.s32 %s43, 1
    %s45 = scalar_select %p42, %s43, %s44
    %p48 = pneg %p42
    %p49 = scmp.eq.s32.totalorder %s7, 1
    %p50 = por %p48, %p49
    %p51 = scmp.ne.s32.totalorder %s43, %s46
    %p52 = scmp.eq.s32.totalorder %s7, 0
    %p53 = por %p51, %p52
    %p54 = scmp.ne.s32.totalorder %s43, %s46
    %p55 = scmp.eq.s32.totalorder %s12, 1
    %p56 = por %p54, %p55
    %p57 = scmp.ne.s32.totalorder %s46, %s47
    %p58 = scmp.eq.s32.totalorder %s12, 0
    %p59 = por %p57, %p58
    %p60 = scmp.ne.s32.totalorder %s46, %s47
    %p61 = scmp.eq.s32.totalorder %s13, 1
    %p62 = por %p60, %p61
    %p64 = scmp.ne.s32.totalorder %s47, %s63
    %p65 = scmp.eq.s32.totalorder %s13, 0
    %p66 = por %p64, %p65
    %p67 = scmp.le.s32.totalorder 1, %s7
    %p68 = scmp.lt.s32.totalorder %s7, 3
    %p69 = pnand %p67, %p68
    %p70 = pneg %p69
    // Predicated region
    $region9: #{dtrocr_forward.13} parent=5 // pred_check
      _
    $region10: #{dtrocr_forward.13} parent=5 // pred_check_branch
      %72 = sbr.rel (%p69) target = $region12
    $region11: #{dtrocr_forward.13} parent=5 // pred_region
      %s73 = ssub.s32 %s7, 1
    $region12: #{dtrocr_forward.13} parent=5 // pred_fallthru
      _
    %p74 = scmp.lt.s32.totalorder %s7, 2
    // Predicated region
    $region13: #{dtrocr_forward.13} parent=5 // pred_check
      %p75 = pneg %p74
    $region14: #{dtrocr_forward.13} parent=5 // pred_check_branch
      %77 = sbr.rel (%p75) target = $region16
    $region15: #{dtrocr_forward.13} parent=5 // pred_region
      // Predicated region
      $region17: #{dtrocr_forward.13} parent=15 // pred_check
        %p78 = pneg %p27
      $region18: #{dtrocr_forward.13} parent=15 // pred_check_branch
        %80 = sbr.rel (%p78) target = $region20
      $region19: #{dtrocr_forward.13} parent=15 // pred_region
        %p81 = scmp.lt.s32.totalorder %s7, 1
        %s82 = scalar_select %p81, %s7, 1
        %s83 = smul.addr %s82, 2
        %s84 = smul.addr %s83, 4
        %s85 = scalar_lea.vmem %s0, %s84
      $region20: #{dtrocr_forward.13} parent=15 // pred_fallthru
        _
    $region16: #{dtrocr_forward.13} parent=5 // pred_fallthru
      _
    %p86 = scmp.le.s32.totalorder 1, %s7
    %p87 = scmp.lt.s32.totalorder %s7, 3
    %p88 = pnand %p86, %p87
    %p89 = pneg %p88
    // Predicated region
    $region21: #{dtrocr_forward.13} parent=5 // pred_check
      _
    $region22: #{dtrocr_forward.13} parent=5 // pred_check_branch
      %91 = sbr.rel (%p88) target = $region24
    $region23: #{dtrocr_forward.13} parent=5 // pred_region
      %s92 = ssub.s32 %s7, 1
      %p93 = scmp.lt.s32.totalorder %s12, 1
      %s94 = scalar_select %p93, %s12, 1
      %s95 = smul.addr %s94, 2
      %s96 = smul.addr %s95, 4
      %s97 = scalar_lea.vmem %s0, %s96
      %p98 = pneg %p33
      %p99 = pneg %p30
      %p100 = pneg %p59
      %p101 = pneg %p56
      %p102 = scmp.lt.s32.totalorder %s12, 1
      %s103 = scalar_select %p102, %s12, 1
      %s104 = smul.addr %s103, 2
      %s105 = smul.addr %s104, 4
      %s106 = scalar_lea.vmem %s1, %s105
      %p107 = scmp.lt.s32.totalorder %s12, 1
      %s108 = scalar_select %p107, %s12, 1
      %s109 = smul.addr %s108, 2
      %s110 = smul.addr %s109, 4
      %s111 = scalar_lea.vmem %s0, %s110
      %p112 = scmp.lt.s32.totalorder %s12, 1
      %s113 = scalar_select %p112, %s12, 1
      %s114 = smul.addr %s113, 2
      %s115 = smul.addr %s114, 4
      %s116 = scalar_lea.vmem %s1, %s115
      %v118 = vld [vmem:[%s111] sm:$0xf]
      %v119 = vld [vmem:[%s111 + $0x4] sm:$0xf]
      %v120 = vlaneseq
      %v121 = vshrl.u32 %v120, 7
      %v122 = vadd.s32 %v121, 8
      %v123 = vlaneseq
      %v124 = vand.u32 %v123, 127
      %vm125 = vcmp.le.s32.totalorder %v124, %v121
      %vm126 = vcmp.le.s32.totalorder %v124, %v122
      %v129 = vunpack.c.l.b16 %v118
      %v130 = vunpack.c.l.b16 %v119
      %v131 = vpack.c.b16 %v130, %v129
      %132 = vrot.lane.b32.xlu0 %v131, 96
      %v133 = vpop.permute.xlu0 %132
      %vm134 = vcmask 64512
      %v136 = vsel %vm134, %v131, 0
      %v139 = vsel %vm134, %v133, 0
      %141 = vmatpush.bf16.xpose.msra.mxu0 0
      %142 = vmatpush.bf16.xpose.msra.mxu0 0
      %143 = vmatpush.bf16.xpose.msra.mxu0 0
      %144 = vmatpush.bf16.xpose.msra.mxu0 0
      %145 = vmatpush.bf16.xpose.msra.mxu0 0
      %146 = vmatpush.bf16.xpose.msra.mxu0 0
      %147 = vmatpush.bf16.xpose.msra.mxu0 0
      %148 = vmatpush.bf16.xpose.msra.mxu0 %v139
      %149 = vmatmul.bf16.gmra.mxu0 %v136
      %v150 = vpop.f32.mrf.mxu0
      %v151 = vadd.f32 0.0, %v150
      %v152 = vpop.f32.mrf.mxu0
      %v153 = vadd.f32 0.0, %v152
      %154 = vdwg.mxu0
      %v155 = vmul.f32 %v151, 0.35355338
      %v156 = vmul.f32 %v153, 0.35355338
      %v157 = vsel %vm125, %v155, -1e+30
      %v158 = vsel %vm126, %v156, -1e+30
      %vm159 = vcmask 130048
      %v160 = vsel %vm159, %v157, -inf
      %161 = vmax.xlane.f32.xlu0 %v160
      %v162 = vpop.xlane.xlu0 %161
      %v163 = vsel %vm159, %v158, -inf
      %164 = vmax.xlane.f32.xlu0 %v163
      %v165 = vpop.xlane.xlu0 %164
      %v166 = vsub.f32 %v157, %v162
      %v167 = vsub.f32 %v158, %v165
      %v168 = vmul.f32 %v166, 1.442695
      %v169 = vpow.pop %v168
      %v170 = vmul.f32 %v167, 1.442695
      %v171 = vpow.pop %v170
      %v172 = vsel %vm159, %v169, 0.0
      %173 = vadd.xlane.f32.xlu0 %v172
      %v174 = vpop.xlane.xlu0 %173
      %v175 = vsel %vm159, %v171, 0.0
      %176 = vadd.xlane.f32.xlu0 %v175
      %v177 = vpop.xlane.xlu0 %176
      %v178 = vrcp.pop %v174
      %v179 = vrcp.pop %v177
      %v180 = vmul.f32 %v169, %v178
      %v181 = vmul.f32 %v171, %v179
      %v182 = vpack.c.bf16 %v181, %v180
      %183 = vrot.lane.b32.xlu0 %v131, 64
      %v184 = vpop.permute.xlu0 %183
      %v187 = vsel %vm159, %v182, 0
      %189 = vmatpush.bf16.msra.mxu0 0
      %190 = vmatpush.bf16.msra.mxu0 0
      %191 = vmatpush.bf16.msra.mxu0 0
      %192 = vmatpush.bf16.msra.mxu0 0
      %193 = vmatpush.bf16.msra.mxu0 0
      %194 = vmatpush.bf16.msra.mxu0 0
      %195 = vmatpush.bf16.msra.mxu0 0
      %196 = vmatpush.bf16.msra.mxu0 %v184
      %197 = vmatmul.bf16.gmra.mxu0 %v187
      %v198 = vpop.f32.mrf.mxu0
      %v199 = vadd.f32 0.0, %v198
      %v200 = vpop.f32.mrf.mxu0
      %v201 = vadd.f32 0.0, %v200
      %202 = vdwg.mxu0
      %v203 = vpack.c.bf16 %v199, %v199
      %v204 = vpack.c.bf16 %v201, %v201
      %vm205 = vcmask 60416
      %206 = vst.msk [vmem:[%s116] sm:$0xf] %vm205, %v203
      %207 = vst.msk [vmem:[%s116 + $0x4] sm:$0xf] %vm205, %v204
      %208 = vrot.lane.b32.xlu0 %v131, 120
      %v209 = vpop.permute.xlu0 %208
      %210 = vrot.lane.b32.xlu0 %v131, 88
      %v211 = vpop.permute.xlu0 %210
      %v213 = vsel %vm134, %v209, 0
      %v216 = vsel %vm134, %v211, 0
      %218 = vmatpush.bf16.xpose.msra.mxu0 0
      %219 = vmatpush.bf16.xpose.msra.mxu0 0
      %220 = vmatpush.bf16.xpose.msra.mxu0 0
      %221 = vmatpush.bf16.xpose.msra.mxu0 0
      %222 = vmatpush.bf16.xpose.msra.mxu0 0
      %223 = vmatpush.bf16.xpose.msra.mxu0 0
      %224 = vmatpush.bf16.xpose.msra.mxu0 0
      %225 = vmatpush.bf16.xpose.msra.mxu0 %v216
      %226 = vmatmul.bf16.gmra.mxu0 %v213
      %v227 = vpop.f32.mrf.mxu0
      %v228 = vadd.f32 0.0, %v227
      %v229 = vpop.f32.mrf.mxu0
      %v230 = vadd.f32 0.0, %v229
      %231 = vdwg.mxu0
      %v232 = vmul.f32 %v228, 0.35355338
      %v233 = vmul.f32 %v230, 0.35355338
      %v234 = vsel %vm125, %v232, -1e+30
      %v235 = vsel %vm126, %v233, -1e+30
      %v236 = vsel %vm159, %v234, -inf
      %237 = vmax.xlane.f32.xlu0 %v236
      %v238 = vpop.xlane.xlu0 %237
      %v239 = vsel %vm159, %v235, -inf
      %240 = vmax.xlane.f32.xlu0 %v239
      %v241 = vpop.xlane.xlu0 %240
      %v242 = vsub.f32 %v234, %v238
      %v243 = vsub.f32 %v235, %v241
      %v244 = vmul.f32 %v242, 1.442695
      %v245 = vpow.pop %v244
      %v246 = vmul.f32 %v243, 1.442695
      %v247 = vpow.pop %v246
      %v248 = vsel %vm159, %v245, 0.0
      %249 = vadd.xlane.f32.xlu0 %v248
      %v250 = vpop.xlane.xlu0 %249
      %v251 = vsel %vm159, %v247, 0.0
      %252 = vadd.xlane.f32.xlu0 %v251
      %v253 = vpop.xlane.xlu0 %252
      %v254 = vrcp.pop %v250
      %v255 = vrcp.pop %v253
      %v256 = vmul.f32 %v245, %v254
      %v257 = vmul.f32 %v247, %v255
      %v258 = vpack.c.bf16 %v257, %v256
      %259 = vrot.lane.b32.xlu0 %v131, 56
      %v260 = vpop.permute.xlu0 %259
      %v263 = vsel %vm159, %v258, 0
      %265 = vmatpush.bf16.msra.mxu0 0
      %266 = vmatpush.bf16.msra.mxu0 0
      %267 = vmatpush.bf16.msra.mxu0 0
      %268 = vmatpush.bf16.msra.mxu0 0
      %269 = vmatpush.bf16.msra.mxu0 0
      %270 = vmatpush.bf16.msra.mxu0 0
      %271 = vmatpush.bf16.msra.mxu0 0
      %272 = vmatpush.bf16.msra.mxu0 %v260
      %273 = vmatmul.bf16.gmra.mxu0 %v263
      %v274 = vpop.f32.mrf.mxu0
      %v275 = vadd.f32 0.0, %v274
      %v276 = vpop.f32.mrf.mxu0
      %v277 = vadd.f32 0.0, %v276
      %278 = vdwg.mxu0
      %v279 = vpack.c.bf16 %v275, %v275
      %v280 = vpack.c.bf16 %v277, %v277
      %283 = vrot.lane.b32.xlu0 %v279, 8
      %v284 = vpop.permute.xlu0 %283
      %285 = vrot.lane.b32.xlu0 %v280, 8
      %v286 = vpop.permute.xlu0 %285
      %vm289 = vcmask 126016
      %290 = vst.msk [vmem:[%s116] sm:$0xf] %vm289, %v284
      %291 = vst.msk [vmem:[%s116 + $0x4] sm:$0xf] %vm289, %v286
      %292 = vrot.lane.b32.xlu0 %v131, 112
      %v293 = vpop.permute.xlu0 %292
      %294 = vrot.lane.b32.xlu0 %v131, 80
      %v295 = vpop.permute.xlu0 %294
      %v297 = vsel %vm134, %v293, 0
      %v300 = vsel %vm134, %v295, 0
      %302 = vmatpush.bf16.xpose.msra.mxu0 0
      %303 = vmatpush.bf16.xpose.msra.mxu0 0
      %304 = vmatpush.bf16.xpose.msra.mxu0 0
      %305 = vmatpush.bf16.xpose.msra.mxu0 0
      %306 = vmatpush.bf16.xpose.msra.mxu0 0
      %307 = vmatpush.bf16.xpose.msra.mxu0 0
      %308 = vmatpush.bf16.xpose.msra.mxu0 0
      %309 = vmatpush.bf16.xpose.msra.mxu0 %v300
      %310 = vmatmul.bf16.gmra.mxu0 %v297
      %v311 = vpop.f32.mrf.mxu0
      %v312 = vadd.f32 0.0, %v311
      %v313 = vpop.f32.mrf.mxu0
      %v314 = vadd.f32 0.0, %v313
      %315 = vdwg.mxu0
      %v316 = vmul.f32 %v312, 0.35355338
      %v317 = vmul.f32 %v314, 0.35355338
      %v318 = vsel %vm125, %v316, -1e+30
      %v319 = vsel %vm126, %v317, -1e+30
      %v320 = vsel %vm159, %v318, -inf
      %321 = vmax.xlane.f32.xlu0 %v320
      %v322 = vpop.xlane.xlu0 %321
      %v323 = vsel %vm159, %v319, -inf
      %324 = vmax.xlane.f32.xlu0 %v323
      %v325 = vpop.xlane.xlu0 %324
      %v326 = vsub.f32 %v318, %v322
      %v327 = vsub.f32 %v319, %v325
      %v328 = vmul.f32 %v326, 1.442695
      %v329 = vpow.pop %v328
      %v330 = vmul.f32 %v327, 1.442695
      %v331 = vpow.pop %v330
      %v332 = vsel %vm159, %v329, 0.0
      %333 = vadd.xlane.f32.xlu0 %v332
      %v334 = vpop.xlane.xlu0 %333
      %v335 = vsel %vm159, %v331, 0.0
      %336 = vadd.xlane.f32.xlu0 %v335
      %v337 = vpop.xlane.xlu0 %336
      %v338 = vrcp.pop %v334
      %v339 = vrcp.pop %v337
      %v340 = vmul.f32 %v329, %v338
      %v341 = vmul.f32 %v331, %v339
      %v342 = vpack.c.bf16 %v341, %v340
      %343 = vrot.lane.b32.xlu0 %v131, 48
      %v344 = vpop.permute.xlu0 %343
      %v347 = vsel %vm159, %v342, 0
      %349 = vmatpush.bf16.msra.mxu0 0
      %350 = vmatpush.bf16.msra.mxu0 0
      %351 = vmatpush.bf16.msra.mxu0 0
      %352 = vmatpush.bf16.msra.mxu0 0
      %353 = vmatpush.bf16.msra.mxu0 0
      %354 = vmatpush.bf16.msra.mxu0 0
      %355 = vmatpush.bf16.msra.mxu0 0
      %356 = vmatpush.bf16.msra.mxu0 %v344
      %357 = vmatmul.bf16.gmra.mxu0 %v347
      %v358 = vpop.f32.mrf.mxu0
      %v359 = vadd.f32 0.0, %v358
      %v360 = vpop.f32.mrf.mxu0
      %v361 = vadd.f32 0.0, %v360
      %362 = vdwg.mxu0
      %v363 = vpack.c.bf16 %v359, %v359
      %v364 = vpack.c.bf16 %v361, %v361
      %367 = vrot.lane.b32.xlu0 %v363, 16
      %v368 = vpop.permute.xlu0 %367
      %369 = vrot.lane.b32.xlu0 %v364, 16
      %v370 = vpop.permute.xlu0 %369
      %vm373 = vcmask 191616
      %374 = vst.msk [vmem:[%s116] sm:$0xf] %vm373, %v368
      %375 = vst.msk [vmem:[%s116 + $0x4] sm:$0xf] %vm373, %v370
      %376 = vrot.lane.b32.xlu0 %v131, 104
      %v377 = vpop.permute.xlu0 %376
      %378 = vrot.lane.b32.xlu0 %v131, 72
      %v379 = vpop.permute.xlu0 %378
      %v381 = vsel %vm134, %v377, 0
      %v384 = vsel %vm134, %v379, 0
      %386 = vmatpush.bf16.xpose.msra.mxu0 0
      %387 = vmatpush.bf16.xpose.msra.mxu0 0
      %388 = vmatpush.bf16.xpose.msra.mxu0 0
      %389 = vmatpush.bf16.xpose.msra.mxu0 0
      %390 = vmatpush.bf16.xpose.msra.mxu0 0
      %391 = vmatpush.bf16.xpose.msra.mxu0 0
      %392 = vmatpush.bf16.xpose.msra.mxu0 0
      %393 = vmatpush.bf16.xpose.msra.mxu0 %v384
      %394 = vmatmul.bf16.gmra.mxu0 %v381
      %v395 = vpop.f32.mrf.mxu0
      %v396 = vadd.f32 0.0, %v395
      %v397 = vpop.f32.mrf.mxu0
      %v398 = vadd.f32 0.0, %v397
      %399 = vdwg.mxu0
      %v400 = vmul.f32 %v396, 0.35355338
      %v401 = vmul.f32 %v398, 0.35355338
      %v402 = vsel %vm125, %v400, -1e+30
      %v403 = vsel %vm126, %v401, -1e+30
      %v404 = vsel %vm159, %v402, -inf
      %405 = vmax.xlane.f32.xlu0 %v404
      %v406 = vpop.xlane.xlu0 %405
      %v407 = vsel %vm159, %v403, -inf
      %408 = vmax.xlane.f32.xlu0 %v407
      %v409 = vpop.xlane.xlu0 %408
      %v410 = vsub.f32 %v402, %v406
      %v411 = vsub.f32 %v403, %v409
      %v412 = vmul.f32 %v410, 1.442695
      %v413 = vpow.pop %v412
      %v414 = vmul.f32 %v411, 1.442695
      %v415 = vpow.pop %v414
      %v416 = vsel %vm159, %v413, 0.0
      %417 = vadd.xlane.f32.xlu0 %v416
      %v418 = vpop.xlane.xlu0 %417
      %v419 = vsel %vm159, %v415, 0.0
      %420 = vadd.xlane.f32.xlu0 %v419
      %v421 = vpop.xlane.xlu0 %420
      %v422 = vrcp.pop %v418
      %v423 = vrcp.pop %v421
      %v424 = vmul.f32 %v413, %v422
      %v425 = vmul.f32 %v415, %v423
      %v426 = vpack.c.bf16 %v425, %v424
      %427 = vrot.lane.b32.xlu0 %v131, 40
      %v428 = vpop.permute.xlu0 %427
      %v431 = vsel %vm159, %v426, 0
      %433 = vmatpush.bf16.msra.mxu0 0
      %434 = vmatpush.bf16.msra.mxu0 0
      %435 = vmatpush.bf16.msra.mxu0 0
      %436 = vmatpush.bf16.msra.mxu0 0
      %437 = vmatpush.bf16.msra.mxu0 0
      %438 = vmatpush.bf16.msra.mxu0 0
      %439 = vmatpush.bf16.msra.mxu0 0
      %440 = vmatpush.bf16.msra.mxu0 %v428
      %441 = vmatmul.bf16.gmra.mxu0 %v431
      %v442 = vpop.f32.mrf.mxu0
      %v443 = vadd.f32 0.0, %v442
      %v444 = vpop.f32.mrf.mxu0
      %v445 = vadd.f32 0.0, %v444
      %446 = vdwg.mxu0
      %v447 = vpack.c.bf16 %v443, %v443
      %v448 = vpack.c.bf16 %v445, %v445
      %451 = vrot.lane.b32.xlu0 %v447, 24
      %v452 = vpop.permute.xlu0 %451
      %453 = vrot.lane.b32.xlu0 %v448, 24
      %v454 = vpop.permute.xlu0 %453
      %vm457 = vcmask 257216
      %458 = vst.msk [vmem:[%s116] sm:$0xf] %vm457, %v452
      %459 = vst.msk [vmem:[%s116 + $0x4] sm:$0xf] %vm457, %v454
      %p460 = scmp.lt.s32.totalorder %s12, 1
      %s461 = scalar_select %p460, %s12, 1
      %s462 = smul.addr %s461, 2
      %s463 = smul.addr %s462, 4
      %s464 = scalar_lea.vmem %s1, %s463
      // Predicated region
      $region25: #{dtrocr_forward.13} parent=23 // pred_check
        %p465 = pneg %p56
      $region26: #{dtrocr_forward.13} parent=23 // pred_check_branch
        %467 = sbr.rel (%p465) target = $region28
      $region27: #{dtrocr_forward.13} parent=23 // pred_region
        _
      $region28: #{dtrocr_forward.13} parent=23 // pred_fallthru
        _
    $region24: #{dtrocr_forward.13} parent=5 // pred_fallthru
      _
    %p468 = scmp.le.s32.totalorder 2, %s7
    // Predicated region
    $region29: #{dtrocr_forward.13} parent=5 // pred_check
      %p469 = pneg %p468
    $region30: #{dtrocr_forward.13} parent=5 // pred_check_branch
      %471 = sbr.rel (%p469) target = $region32
    $region31: #{dtrocr_forward.13} parent=5 // pred_region
      %s472 = ssub.s32 %s7, 2
      // Predicated region
      $region33: #{dtrocr_forward.13} parent=31 // pred_check
        %p473 = pneg %p62
      $region34: #{dtrocr_forward.13} parent=31 // pred_check_branch
        %475 = sbr.rel (%p473) target = $region36
      $region35: #{dtrocr_forward.13} parent=31 // pred_region
        %p476 = scmp.lt.s32.totalorder %s13, 1
        %s477 = scalar_select %p476, %s13, 1
        %s478 = smul.addr %s477, 2
        %s479 = smul.addr %s478, 4
        %s480 = scalar_lea.vmem %s1, %s479
      $region36: #{dtrocr_forward.13} parent=31 // pred_fallthru
        _
    $region32: #{dtrocr_forward.13} parent=5 // pred_fallthru
      _
  $region6: #{dtrocr_forward.13} parent=0 // loop_footer
    %s11 = sadd.s32 1, %s7
  $region7: #{dtrocr_forward.13} parent=0 // loop_footer_branch
    %6 = sbr.rel target = $region3
  $region8: #{dtrocr_forward.13} parent=0 // loop_exit
    _

// kernel: dtrocr_forward.15
$region0: #{dtrocr_forward.15}
  #allocation0 [shape = 'u32[]', space=smem, size = 0x4, offset = 0x4, fixed_abs, tag = 'smem constant byte address 0x4 - core index']
  #allocation1 [shape = 'u32[72,128]{1,0:T(1,128)}', space=vmem, size = 0x9000, scoped, tag = 'internal scratch']
  #allocation2 [shape = 'f32[32,64]{1,0:T(8,128)}', space=vmem, size = 0x4000, scoped, tag = 'scratch operand']
  %s0 = inlined_call_operand.vmem [shape: bf16[32,32], index: 0, kind: input, shape index: {}]
  %s1 = inlined_call_operand.vmem [shape: bf16[32,64], index: 1, kind: input, shape index: {}]
  %s2 = inlined_call_operand.vmem [shape: f32[1,64], index: 2, kind: input, shape index: {}]
  %s3 = inlined_call_operand.vmem [shape: bf16[32,64], index: 3, kind: output, shape index: {}]
  %s4 = sld [smem:[#allocation0]]
  $region30: #{dtrocr_forward.15} parent=0
    _
  %s6 = ssub.s32 1, %s4
  %s7 = scalar_select 0, %s6, %s4
  // Predicated region
  $region2: #{dtrocr_forward.15} parent=0 // pred_check
    _
  $region3: #{dtrocr_forward.15} parent=0 // pred_check_branch
    %9 = sbr.rel (0) target = $region5
  $region4: #{dtrocr_forward.15} parent=0 // pred_region
    _
  $region5: #{dtrocr_forward.15} parent=0 // pred_fallthru
    _
  // Predicated region
  $region6: #{dtrocr_forward.15} parent=0 // pred_check
    _
  $region7: #{dtrocr_forward.15} parent=0 // pred_check_branch
    %11 = sbr.rel (0) target = $region9
  $region8: #{dtrocr_forward.15} parent=0 // pred_region
    _
  $region9: #{dtrocr_forward.15} parent=0 // pred_fallthru
    _
  // Predicated region
  $region10: #{dtrocr_forward.15} parent=0 // pred_check
    _
  $region11: #{dtrocr_forward.15} parent=0 // pred_check_branch
    %13 = sbr.rel (0) target = $region13
  $region12: #{dtrocr_forward.15} parent=0 // pred_region
    _
  $region13: #{dtrocr_forward.15} parent=0 // pred_fallthru
    _
  %p15 = scmp.eq.s32.totalorder 0, 0
  // Predicated region
  $region14: #{dtrocr_forward.15} parent=0 // pred_check
    %p16 = pneg %p15
  $region15: #{dtrocr_forward.15} parent=0 // pred_check_branch
    %18 = sbr.rel (%p16) target = $region17
  $region16: #{dtrocr_forward.15} parent=0 // pred_region
    %vm19 = vcmask 523264
    %20 = vst.msk [vmem:[#allocation2] sm:$0xff] %vm19, 0.0
    %21 = vst.msk [vmem:[#allocation2 + $0x8] sm:$0xff] %vm19, 0.0
    %22 = vst.msk [vmem:[#allocation2 + $0x10] sm:$0xff] %vm19, 0.0
    %23 = vst.msk [vmem:[#allocation2 + $0x18] sm:$0xff] %vm19, 0.0
  $region17: #{dtrocr_forward.15} parent=0 // pred_fallthru
    _
  %v24 = vld [vmem:[#allocation2] sm:$0xff]
  %v25 = vld [vmem:[#allocation2 + $0x8] sm:$0xff]
  %v26 = vld [vmem:[#allocation2 + $0x10] sm:$0xff]
  %v27 = vld [vmem:[#allocation2 + $0x18] sm:$0xff]
  %v28 = vld [vmem:[%s0] sm:$0xf]
  %v29 = vld [vmem:[%s0 + $0x4] sm:$0xf]
  %v30 = vld [vmem:[%s0 + $0x8] sm:$0xf]
  %v31 = vld [vmem:[%s0 + $0xc] sm:$0xf]
  %v32 = vld [vmem:[%s1] sm:$0xf]
  %v33 = vld [vmem:[%s1 + $0x4] sm:$0xf]
  %v34 = vld [vmem:[%s1 + $0x8] sm:$0xf]
  %v35 = vld [vmem:[%s1 + $0xc] sm:$0xf]
  %v40 = vunpack.c.l.b16 %v28
  %v41 = vunpack.c.l.b16 %v29
  %v42 = vunpack.c.l.b16 %v30
  %v43 = vunpack.c.l.b16 %v31
  %v44 = vpack.c.b16 %v41, %v40
  %v45 = vpack.c.b16 %v43, %v42
  %v50 = vunpack.c.l.b16 %v32
  %v51 = vunpack.c.l.b16 %v33
  %v52 = vunpack.c.l.b16 %v34
  %v53 = vunpack.c.l.b16 %v35
  %v54 = vpack.c.b16 %v51, %v50
  %v55 = vpack.c.b16 %v53, %v52
  %vm58 = vcmask 261120
  %v60 = vsel %vm58, %v44, 0
  %v63 = vsel %vm58, %v45, 0
  %65 = vmatpush.bf16.msra.mxu0 0
  %66 = vmatpush.bf16.msra.mxu0 0
  %67 = vmatpush.bf16.msra.mxu0 0
  %68 = vmatpush.bf16.msra.mxu0 0
  %69 = vmatpush.bf16.msra.mxu0 0
  %70 = vmatpush.bf16.msra.mxu0 0
  %71 = vmatpush.bf16.msra.mxu0 %v55
  %72 = vmatpush.bf16.msra.mxu0 %v54
  %73 = vmatmul.bf16.gmra.mxu0 %v60
  %v74 = vpop.f32.mrf.mxu0
  %v75 = vadd.f32 0.0, %v74
  %v76 = vpop.f32.mrf.mxu0
  %v77 = vadd.f32 0.0, %v76
  %78 = vmatmul.bf16.gmra.mxu0 %v63
  %v79 = vpop.f32.mrf.mxu0
  %v80 = vadd.f32 0.0, %v79
  %v81 = vpop.f32.mrf.mxu0
  %v82 = vadd.f32 0.0, %v81
  %83 = vdwg.mxu0
  %v84 = vadd.f32 %v24, %v75
  %v85 = vadd.f32 %v25, %v77
  %v86 = vadd.f32 %v26, %v80
  %v87 = vadd.f32 %v27, %v82
  %vm88 = vcmask 523264
  %89 = vst.msk [vmem:[#allocation2] sm:$0xff] %vm88, %v84
  %90 = vst.msk [vmem:[#allocation2 + $0x8] sm:$0xff] %vm88, %v85
  %91 = vst.msk [vmem:[#allocation2 + $0x10] sm:$0xff] %vm88, %v86
  %92 = vst.msk [vmem:[#allocation2 + $0x18] sm:$0xff] %vm88, %v87
  // Predicated region
  $region18: #{dtrocr_forward.15} parent=0 // pred_check
    %p93 = pneg %p15
  $region19: #{dtrocr_forward.15} parent=0 // pred_check_branch
    %95 = sbr.rel (%p93) target = $region21
  $region20: #{dtrocr_forward.15} parent=0 // pred_region
    %v96 = vld [vmem:[#allocation2] sm:$0xff]
    %v97 = vld [vmem:[#allocation2 + $0x8] sm:$0xff]
    %v98 = vld [vmem:[#allocation2 + $0x10] sm:$0xff]
    %v99 = vld [vmem:[#allocation2 + $0x18] sm:$0xff]
    %v100 = vld [vmem:[%s2] sm:$0x1]
    %v102 = vperm.slane %v100, 0
    %v104 = vadd.f32 %v96, %v102
    %v105 = vadd.f32 %v97, %v102
    %v106 = vadd.f32 %v98, %v102
    %v107 = vadd.f32 %v99, %v102
    %v108 = vmul.f32 %v104, %v104
    %v109 = vmul.f32 %v105, %v105
    %v110 = vmul.f32 %v106, %v106
    %v111 = vmul.f32 %v107, %v107
    %v112 = vmul.f32 %v104, %v108
    %v113 = vmul.f32 %v105, %v109
    %v114 = vmul.f32 %v106, %v110
    %v115 = vmul.f32 %v107, %v111
    %v116 = vmul.f32 %v112, 0.044715
    %v117 = vmul.f32 %v113, 0.044715
    %v118 = vmul.f32 %v114, 0.044715
    %v119 = vmul.f32 %v115, 0.044715
    %v120 = vadd.f32 %v104, %v116
    %v121 = vadd.f32 %v105, %v117
    %v122 = vadd.f32 %v106, %v118
    %v123 = vadd.f32 %v107, %v119
    %v124 = vmul.f32 %v120, 0.7978846
    %v125 = vmul.f32 %v121, 0.7978846
    %v126 = vmul.f32 %v122, 0.7978846
    %v127 = vmul.f32 %v123, 0.7978846
    %v128 = vtanh.pop %v124
    %v129 = vtanh.pop %v125
    %v130 = vtanh.pop %v126
    %v131 = vtanh.pop %v127
    %v132 = vadd.f32 %v128, 1.0
    %v133 = vadd.f32 %v129, 1.0
    %v134 = vadd.f32 %v130, 1.0
    %v135 = vadd.f32 %v131, 1.0
    %v136 = vmul.f32 %v132, 0.5
    %v137 = vmul.f32 %v133, 0.5
    %v138 = vmul.f32 %v134, 0.5
    %v139 = vmul.f32 %v135, 0.5
    %v140 = vmul.f32 %v104, %v136
    %v141 = vmul.f32 %v105, %v137
    %v142 = vmul.f32 %v106, %v138
    %v143 = vmul.f32 %v107, %v139
    %v144 = vpack.c.bf16 %v140, %v140
    %v145 = vpack.c.bf16 %v141, %v141
    %v146 = vpack.c.bf16 %v142, %v142
    %v147 = vpack.c.bf16 %v143, %v143
    %vm148 = vcmask 519168
    %149 = vst.msk [vmem:[%s3] sm:$0xf] %vm148, %v144
    %150 = vst.msk [vmem:[%s3 + $0x4] sm:$0xf] %vm148, %v145
    %151 = vst.msk [vmem:[%s3 + $0x8] sm:$0xf] %vm148, %v146
    %152 = vst.msk [vmem:[%s3 + $0xc] sm:$0xf] %vm148, %v147
  $region21: #{dtrocr_forward.15} parent=0 // pred_fallthru
    _
  // Predicated region
  $region22: #{dtrocr_forward.15} parent=0 // pred_check
    _
  $region23: #{dtrocr_forward.15} parent=0 // pred_check_branch
    %154 = sbr.rel (0) target = $region25
  $region24: #{dtrocr_forward.15} parent=0 // pred_region
    _
  $region25: #{dtrocr_forward.15} parent=0 // pred_fallthru
    _
  // Predicated region
  $region26: #{dtrocr_forward.15} parent=0 // pred_check
    _
  $region27: #{dtrocr_forward.15} parent=0 // pred_check_branch
    %156 = sbr.rel (0) target = $region29
  $region28: #{dtrocr_forward.15} parent=0 // pred_region
    _
  $region29: #{dtrocr_forward.15} parent=0 // pred_fallthru
    _

// kernel: dtrocr_forward.16
$region0: #{dtrocr_forward.16}
  #allocation0 [shape = 'u32[]', space=smem, size = 0x4, offset = 0x4, fixed_abs, tag = 'smem constant byte address 0x4 - core index']
  #allocation1 [shape = 'u32[72,128]{1,0:T(1,128)}', space=vmem, size = 0x9000, scoped, tag = 'internal scratch']
  #allocation2 [shape = 'f32[32,32]{1,0:T(8,128)}', space=vmem, size = 0x4000, scoped, tag = 'scratch operand']
  %s0 = inlined_call_operand.vmem [shape: bf16[32,64], index: 0, kind: input, shape index: {}]
  %s1 = inlined_call_operand.vmem [shape: bf16[64,32], index: 1, kind: input, shape index: {}]
  %s2 = inlined_call_operand.vmem [shape: f32[1,32], index: 2, kind: input, shape index: {}]
  %s3 = inlined_call_operand.vmem [shape: bf16[32,32], index: 3, kind: input, shape index: {}]
  %s4 = inlined_call_operand.vmem [shape: f32[1,32], index: 4, kind: input, shape index: {}]
  %s5 = inlined_call_operand.vmem [shape: f32[1,32], index: 5, kind: input, shape index: {}]
  %s6 = inlined_call_operand.vmem [shape: bf16[32,32], index: 6, kind: output, shape index: {}]
  %s7 = sld [smem:[#allocation0]]
  $region42: #{dtrocr_forward.16} parent=0
    _
  %s9 = ssub.s32 1, %s7
  %s10 = scalar_select 0, %s9, %s7
  // Predicated region
  $region2: #{dtrocr_forward.16} parent=0 // pred_check
    _
  $region3: #{dtrocr_forward.16} parent=0 // pred_check_branch
    %12 = sbr.rel (0) target = $region5
  $region4: #{dtrocr_forward.16} parent=0 // pred_region
    _
  $region5: #{dtrocr_forward.16} parent=0 // pred_fallthru
    _
  // Predicated region
  $region6: #{dtrocr_forward.16} parent=0 // pred_check
    _
  $region7: #{dtrocr_forward.16} parent=0 // pred_check_branch
    %14 = sbr.rel (0) target = $region9
  $region8: #{dtrocr_forward.16} parent=0 // pred_region
    _
  $region9: #{dtrocr_forward.16} parent=0 // pred_fallthru
    _
  // Predicated region
  $region10: #{dtrocr_forward.16} parent=0 // pred_check
    _
  $region11: #{dtrocr_forward.16} parent=0 // pred_check_branch
    %16 = sbr.rel (0) target = $region13
  $region12: #{dtrocr_forward.16} parent=0 // pred_region
    _
  $region13: #{dtrocr_forward.16} parent=0 // pred_fallthru
    _
  // Predicated region
  $region14: #{dtrocr_forward.16} parent=0 // pred_check
    _
  $region15: #{dtrocr_forward.16} parent=0 // pred_check_branch
    %18 = sbr.rel (0) target = $region17
  $region16: #{dtrocr_forward.16} parent=0 // pred_region
    _
  $region17: #{dtrocr_forward.16} parent=0 // pred_fallthru
    _
  // Predicated region
  $region18: #{dtrocr_forward.16} parent=0 // pred_check
    _
  $region19: #{dtrocr_forward.16} parent=0 // pred_check_branch
    %20 = sbr.rel (0) target = $region21
  $region20: #{dtrocr_forward.16} parent=0 // pred_region
    _
  $region21: #{dtrocr_forward.16} parent=0 // pred_fallthru
    _
  // Predicated region
  $region22: #{dtrocr_forward.16} parent=0 // pred_check
    _
  $region23: #{dtrocr_forward.16} parent=0 // pred_check_branch
    %22 = sbr.rel (0) target = $region25
  $region24: #{dtrocr_forward.16} parent=0 // pred_region
    _
  $region25: #{dtrocr_forward.16} parent=0 // pred_fallthru
    _
  %p24 = scmp.eq.s32.totalorder 0, 0
  // Predicated region
  $region26: #{dtrocr_forward.16} parent=0 // pred_check
    %p25 = pneg %p24
  $region27: #{dtrocr_forward.16} parent=0 // pred_check_branch
    %27 = sbr.rel (%p25) target = $region29
  $region28: #{dtrocr_forward.16} parent=0 // pred_region
    %vm28 = vcmask 261120
    %29 = vst.msk [vmem:[#allocation2] sm:$0xff] %vm28, 0.0
    %30 = vst.msk [vmem:[#allocation2 + $0x8] sm:$0xff] %vm28, 0.0
    %31 = vst.msk [vmem:[#allocation2 + $0x10] sm:$0xff] %vm28, 0.0
    %32 = vst.msk [vmem:[#allocation2 + $0x18] sm:$0xff] %vm28, 0.0
  $region29: #{dtrocr_forward.16} parent=0 // pred_fallthru
    _
  %v33 = vld [vmem:[#allocation2] sm:$0xff]
  %v34 = vld [vmem:[#allocation2 + $0x8] sm:$0xff]
  %v35 = vld [vmem:[#allocation2 + $0x10] sm:$0xff]
  %v36 = vld [vmem:[#allocation2 + $0x18] sm:$0xff]
  %v37 = vld [vmem:[%s0] sm:$0xf]
  %v38 = vld [vmem:[%s0 + $0x4] sm:$0xf]
  %v39 = vld [vmem:[%s0 + $0x8] sm:$0xf]
  %v40 = vld [vmem:[%s0 + $0xc] sm:$0xf]
  %v41 = vld [vmem:[%s1] sm:$0xf]
  %v42 = vld [vmem:[%s1 + $0x4] sm:$0xf]
  %v43 = vld [vmem:[%s1 + $0x8] sm:$0xf]
  %v44 = vld [vmem:[%s1 + $0xc] sm:$0xf]
  %v45 = vld [vmem:[%s1 + $0x10] sm:$0xf]
  %v46 = vld [vmem:[%s1 + $0x14] sm:$0xf]
  %v47 = vld [vmem:[%s1 + $0x18] sm:$0xf]
  %v48 = vld [vmem:[%s1 + $0x1c] sm:$0xf]
  %v53 = vunpack.c.l.b16 %v37
  %v54 = vunpack.c.l.b16 %v38
  %v55 = vunpack.c.l.b16 %v39
  %v56 = vunpack.c.l.b16 %v40
  %v57 = vpack.c.b16 %v54, %v53
  %v58 = vpack.c.b16 %v56, %v55
  %v67 = vunpack.c.l.b16 %v41
  %v68 = vunpack.c.l.b16 %v42
  %v69 = vunpack.c.l.b16 %v43
  %v70 = vunpack.c.l.b16 %v44
  %v71 = vunpack.c.l.b16 %v45
  %v72 = vunpack.c.l.b16 %v46
  %v73 = vunpack.c.l.b16 %v47
  %v74 = vunpack.c.l.b16 %v48
  %v75 = vpack.c.b16 %v68, %v67
  %v76 = vpack.c.b16 %v70, %v69
  %v77 = vpack.c.b16 %v72, %v71
  %v78 = vpack.c.b16 %v74, %v73
  %vm83 = vcmask 523264
  %v85 = vsel %vm83, %v57, 0
  %v88 = vsel %vm83, %v58, 0
  %90 = vmatpush.bf16.msra.mxu0 0
  %91 = vmatpush.bf16.msra.mxu0 0
  %92 = vmatpush.bf16.msra.mxu0 0
  %93 = vmatpush.bf16.msra.mxu0 0
  %94 = vmatpush.bf16.msra.mxu0 %v78
  %95 = vmatpush.bf16.msra.mxu0 %v77
  %96 = vmatpush.bf16.msra.mxu0 %v76
  %97 = vmatpush.bf16.msra.mxu0 %v75
  %98 = vmatmul.bf16.gmra.mxu0 %v85
  %v99 = vpop.f32.mrf.mxu0
  %v100 = vadd.f32 0.0, %v99
  %v101 = vpop.f32.mrf.mxu0
  %v102 = vadd.f32 0.0, %v101
  %103 = vmatmul.bf16.gmra.mxu0 %v88
  %v104 = vpop.f32.mrf.mxu0
  %v105 = vadd.f32 0.0, %v104
  %v106 = vpop.f32.mrf.mxu0
  %v107 = vadd.f32 0.0, %v106
  %108 = vdwg.mxu0
  %v109 = vadd.f32 %v33, %v100
  %v110 = vadd.f32 %v34, %v102
  %v111 = vadd.f32 %v35, %v105
  %v112 = vadd.f32 %v36, %v107
  %vm113 = vcmask 261120
  %114 = vst.msk [vmem:[#allocation2] sm:$0xff] %vm113, %v109
  %115 = vst.msk [vmem:[#allocation2 + $0x8] sm:$0xff] %vm113, %v110
  %116 = vst.msk [vmem:[#allocation2 + $0x10] sm:$0xff] %vm113, %v111
  %117 = vst.msk [vmem:[#allocation2 + $0x18] sm:$0xff] %vm113, %v112
  // Predicated region
  $region30: #{dtrocr_forward.16} parent=0 // pred_check
    %p118 = pneg %p24
  $region31: #{dtrocr_forward.16} parent=0 // pred_check_branch
    %120 = sbr.rel (%p118) target = $region33
  $region32: #{dtrocr_forward.16} parent=0 // pred_region
    %v121 = vld [vmem:[#allocation2] sm:$0xff]
    %v122 = vld [vmem:[#allocation2 + $0x8] sm:$0xff]
    %v123 = vld [vmem:[#allocation2 + $0x10] sm:$0xff]
    %v124 = vld [vmem:[#allocation2 + $0x18] sm:$0xff]
    %v125 = vld [vmem:[%s2] sm:$0x1]
    %v127 = vperm.slane %v125, 0
    %v129 = vadd.f32 %v121, %v127
    %v130 = vadd.f32 %v122, %v127
    %v131 = vadd.f32 %v123, %v127
    %v132 = vadd.f32 %v124, %v127
    %v133 = vld [vmem:[%s3] sm:$0xf]
    %v134 = vld [vmem:[%s3 + $0x4] sm:$0xf]
    %v135 = vld [vmem:[%s3 + $0x8] sm:$0xf]
    %v136 = vld [vmem:[%s3 + $0xc] sm:$0xf]
    %v137 = vunpack.c.l.bf16 %v133
    %v138 = vunpack.c.l.bf16 %v134
    %v139 = vunpack.c.l.bf16 %v135
    %v140 = vunpack.c.l.bf16 %v136
    %v141 = vadd.f32 %v129, %v137
    %v142 = vadd.f32 %v130, %v138
    %v143 = vadd.f32 %v131, %v139
    %v144 = vadd.f32 %v132, %v140
    %v145 = vsel %vm113, %v141, 0.0
    %146 = vadd.xlane.f32.xlu0 %v145
    %v147 = vpop.xlane.xlu0 %146
    %v148 = vsel %vm113, %v142, 0.0
    %149 = vadd.xlane.f32.xlu0 %v148
    %v150 = vpop.xlane.xlu0 %149
    %v151 = vsel %vm113, %v143, 0.0
    %152 = vadd.xlane.f32.xlu0 %v151
    %v153 = vpop.xlane.xlu0 %152
    %v154 = vsel %vm113, %v144, 0.0
    %155 = vadd.xlane.f32.xlu0 %v154
    %v156 = vpop.xlane.xlu0 %155
    %v157 = vrcp.pop 32.0
    %v158 = vmul.f32 32.0, %v157
    %v159 = vsub.f32 1.0, %v158
    %v160 = vmul.f32 %v157, %v159
    %v161 = vadd.f32 %v157, %v160
    %vm162 = vweird.f32 %v157
    %v163 = vsel %vm162, %v157, %v161
    %v164 = vmul.f32 %v147, %v163
    %v165 = vmul.f32 %v150, %v163
    %v166 = vmul.f32 %v153, %v163
    %v167 = vmul.f32 %v156, %v163
    %v168 = vsub.f32 %v141, %v164
    %v169 = vsub.f32 %v142, %v165
    %v170 = vsub.f32 %v143, %v166
    %v171 = vsub.f32 %v144, %v167
    %v172 = vmul.f32 %v168, %v168
    %v173 = vmul.f32 %v169, %v169
    %v174 = vmul.f32 %v170, %v170
    %v175 = vmul.f32 %v171, %v171
    %v176 = vsel %vm113, %v172, 0.0
    %177 = vadd.xlane.f32.xlu0 %v176
    %v178 = vpop.xlane.xlu0 %177
    %v179 = vsel %vm113, %v173, 0.0
    %180 = vadd.xlane.f32.xlu0 %v179
    %v181 = vpop.xlane.xlu0 %180
    %v182 = vsel %vm113, %v174, 0.0
    %183 = vadd.xlane.f32.xlu0 %v182
    %v184 = vpop.xlane.xlu0 %183
    %v185 = vsel %vm113, %v175, 0.0
    %186 = vadd.xlane.f32.xlu0 %v185
    %v187 = vpop.xlane.xlu0 %186
    %v188 = vmul.f32 %v178, %v163
    %v189 = vmul.f32 %v181, %v163
    %v190 = vmul.f32 %v184, %v163
    %v191 = vmul.f32 %v187, %v163
    %v192 = vadd.f32 %v188, 1e-05
    %v193 = vadd.f32 %v189, 1e-05
    %v194 = vadd.f32 %v190, 1e-05
    %v195 = vadd.f32 %v191, 1e-05
    %v196 = vrsqrt.pop %v192
    %v197 = vmul.f32 %v196, %v192
    %v198 = vmul.f32 %v197, %v196
    %v199 = vmul.f32 0.5, %v198
    %v200 = vsub.f32 1.5, %v199
    %v201 = vmul.f32 %v196, %v200
    %vm202 = vweird.f32 %v192
    %vm203 = vweird.f32 %v196
    %vm204 = vmor %vm202, %vm203
    %v205 = vsel %vm204, %v196, %v201
    %v206 = vrsqrt.pop %v193
    %v207 = vmul.f32 %v206, %v193
    %v208 = vmul.f32 %v207, %v206
    %v209 = vmul.f32 0.5, %v208
    %v210 = vsub.f32 1.5, %v209
    %v211 = vmul.f32 %v206, %v210
    %vm212 = vweird.f32 %v193
    %vm213 = vweird.f32 %v206
    %vm214 = vmor %vm212, %vm213
    %v215 = vsel %vm214, %v206, %v211
    %v216 = vrsqrt.pop %v194
    %v217 = vmul.f32 %v216, %v194
    %v218 = vmul.f32 %v217, %v216
    %v219 = vmul.f32 0.5, %v218
    %v220 = vsub.f32 1.5, %v219
    %v221 = vmul.f32 %v216, %v220
    %vm222 = vweird.f32 %v194
    %vm223 = vweird.f32 %v216
    %vm224 = vmor %vm222, %vm223
    %v225 = vsel %vm224, %v216, %v221
    %v226 = vrsqrt.pop %v195
    %v227 = vmul.f32 %v226, %v195
    %v228 = vmul.f32 %v227, %v226
    %v229 = vmul.f32 0.5, %v228
    %v230 = vsub.f32 1.5, %v229
    %v231 = vmul.f32 %v226, %v230
    %vm232 = vweird.f32 %v195
    %vm233 = vweird.f32 %v226
    %vm234 = vmor %vm232, %vm233
    %v235 = vsel %vm234, %v226, %v231
    %v236 = vmul.f32 %v168, %v205
    %v237 = vmul.f32 %v169, %v215
    %v238 = vmul.f32 %v170, %v225
    %v239 = vmul.f32 %v171, %v235
    %v240 = vld [vmem:[%s4] sm:$0x1]
    %v242 = vperm.slane %v240, 0
    %v244 = vmul.f32 %v236, %v242
    %v245 = vmul.f32 %v237, %v242
    %v246 = vmul.f32 %v238, %v242
    %v247 = vmul.f32 %v239, %v242
    %v248 = vld [vmem:[%s5] sm:$0x1]
    %v250 = vperm.slane %v248, 0
    %v252 = vadd.f32 %v244, %v250
    %v253 = vadd.f32 %v245, %v250
    %v254 = vadd.f32 %v246, %v250
    %v255 = vadd.f32 %v247, %v250
    %v256 = vpack.c.bf16 %v252, %v252
    %v257 = vpack.c.bf16 %v253, %v253
    %v258 = vpack.c.bf16 %v254, %v254
    %v259 = vpack.c.bf16 %v255, %v255
    %vm260 = vcmask 257024
    %261 = vst.msk [vmem:[%s6] sm:$0xf] %vm260, %v256
    %262 = vst.msk [vmem:[%s6 + $0x4] sm:$0xf] %vm260, %v257
    %263 = vst.msk [vmem:[%s6 + $0x8] sm:$0xf] %vm260, %v258
    %264 = vst.msk [vmem:[%s6 + $0xc] sm:$0xf] %vm260, %v259
  $region33: #{dtrocr_forward.16} parent=0 // pred_fallthru
    _
  // Predicated region
  $region34: #{dtrocr_forward.16} parent=0 // pred_check
    _
  $region35: #{dtrocr_forward.16} parent=0 // pred_check_branch
    %266 = sbr.rel (0) target = $region37
  $region36: #{dtrocr_forward.16} parent=0 // pred_region
    _
  $region37: #{dtrocr_forward.16} parent=0 // pred_fallthru
    _
  // Predicated region
  $region38: #{dtrocr_forward.16} parent=0 // pred_check
    _
  $region39: #{dtrocr_forward.16} parent=0 // pred_check_branch
    %268 = sbr.rel (0) target = $region41
  $region40: #{dtrocr_forward.16} parent=0 // pred_region
    _
  $region41: #{dtrocr_forward.16} parent=0 // pred_fallthru
    _

</llo_original>
